<compile_context>
chip_gen: v5e
topology: v5e:2x2
jax: 0.10.0
libtpu: 0.0.40
codegen_flags: <defaults>
</compile_context>

<pallas_src>
import functools

import jax
import jax.numpy as jnp
from jax.experimental import pallas as pl
from jax.experimental.pallas import tpu as pltpu  # noqa: F401  (imported per convention)

# ----------------------------- config (small shapes) -----------------------------
VOCAB_SIZE = 50
EMB_DIM = 32
HIDDEN_DIM = 32
OUTPUT_DIM = 4
N_LAYERS = 2
BIDIRECTIONAL = True
SEQ_LEN = 8
BATCH = 2
FC_PAD = 128          # fc output padded to a full lane tile (lane-dense store)
BATCH_PAD = 8         # batch padded to one sublane granule


# ----------------------------- fused Pallas kernel --------------------------------
def _fused_rnn_kernel(x_ref, wih0_ref, whh0_ref, b0_ref,
                      wih1_ref, whh1_ref, b1_ref,
                      fcw_ref, fcb_ref, out_ref, *, seq_len, batch_pad, hidden):
    S, Bp, H = seq_len, batch_pad, hidden
    G = 8 * H  # 4 gates x 2 directions packed along lanes (= 256)

    # Column masks. Each 2H-wide gate block is laid out [fwd(0:H) | bwd(H:2H)].
    col_g = jax.lax.broadcasted_iota(jnp.int32, (1, G), 1)
    fwd_cols_g = (col_g % (2 * H)) < H
    col_2h = jax.lax.broadcasted_iota(jnp.int32, (1, 2 * H), 1)
    fwd_cols_2h = col_2h < H

    def merge_time_blocks(gx):
        """gx: (S*Bp, G) time-ordered input projections.
        Returns a list of per-step blocks: fwd gate columns from time t, bwd gate
        columns from time S-1-t.  Built once per layer, OFF the recurrence chain."""
        blocks = []
        for t in range(S):
            rt = S - 1 - t
            blocks.append(jnp.where(fwd_cols_g,
                                    gx[t * Bp:(t + 1) * Bp, :],
                                    gx[rt * Bp:(rt + 1) * Bp, :]))
        return blocks

    def run_layer(gx_blocks, whh_bf16, collect_outputs):
        """One bidirectional LSTM layer; per step a single (Bp,2H)x(2H,G) bf16 MXU dot."""
        h = jnp.zeros((Bp, 2 * H), jnp.float32)        # [h_fwd | h_bwd]
        c = jnp.zeros((Bp, 2 * H), jnp.float32)        # [c_fwd | c_bwd]
        hs = []
        # Fully unrolled time loop (S=8): static offsets, states stay in vregs.
        for t in range(S):
            gates = gx_blocks[t] + jnp.dot(h.astype(jnp.bfloat16), whh_bf16,
                                           preferred_element_type=jnp.float32)
            i = jax.nn.sigmoid(gates[:, 0:2 * H])          # [i_f | i_b]
            f = jax.nn.sigmoid(gates[:, 2 * H:4 * H])      # [f_f | f_b]
            g = jnp.tanh(gates[:, 4 * H:6 * H])            # [g_f | g_b]
            o = jax.nn.sigmoid(gates[:, 6 * H:8 * H])      # [o_f | o_b]
            c = f * c + i * g
            h = o * jnp.tanh(c)
            if collect_outputs:
                hs.append(h)
        return h, hs

    whh0 = whh0_ref[...]   # (2H, G) bf16, block-diagonal
    whh1 = whh1_ref[...]   # (2H, G) bf16, block-diagonal

    # ---- layer 0: input projection for ALL timesteps in one MXU call (M = S*Bp) ----
    gx0 = jnp.dot(x_ref[...], wih0_ref[...],
                  preferred_element_type=jnp.float32) + b0_ref[...]
    _, hs0 = run_layer(merge_time_blocks(gx0), whh0, collect_outputs=True)

    # ---- layer 1 input at time t is [h0_fwd(t) | h0_bwd(t)]:
    #      fwd half from layer-0 step t, bwd half from layer-0 step S-1-t.
    #      Single (S*Bp,2H) select + ONE (S*Bp,2H)x(2H,G) matmul. ----
    y01 = jnp.concatenate(
        [jnp.where(fwd_cols_2h, hs0[t], hs0[S - 1 - t]) for t in range(S)], axis=0)
    gx1 = jnp.dot(y01.astype(jnp.bfloat16), wih1_ref[...],
                  preferred_element_type=jnp.float32) + b1_ref[...]
    h1, _ = run_layer(merge_time_blocks(gx1), whh1, collect_outputs=False)

    # ---- fc head fused as epilogue: h1 = [h_fwd_final | h_bwd_final] (Bp, 2H);
    #      output is lane-dense (Bp, 128), real logits live in lanes 0:OUTPUT_DIM. ----
    out_ref[...] = (jnp.dot(h1.astype(jnp.bfloat16), fcw_ref[...],
                            preferred_element_type=jnp.float32) + fcb_ref[...])


# ----------------------------- weight packing --------------------------------------
def _pack_gate_cols(m_fwd, m_bwd):
    """(4H, K) PyTorch-layout per-direction weight -> (K, 8H).
    Output column gate*2H + dir*H + j  <-  row gate*H + j of direction `dir`."""
    four_h, k = m_fwd.shape
    h = four_h // 4
    stacked = jnp.stack([m_fwd.reshape(4, h, k), m_bwd.reshape(4, h, k)], axis=1)
    return stacked.reshape(8 * h, k).T


def _pack_gate_bias(b_fwd, b_bwd):
    h = b_fwd.shape[0] // 4
    return jnp.stack([b_fwd.reshape(4, h), b_bwd.reshape(4, h)], axis=1).reshape(1, 8 * h)


def _pack_recurrent(w_hh_fwd, w_hh_bwd):
    """(4H, H) recurrent weights -> (2H, 8H) block-diagonal:
    rows 0:H (h_fwd) feed only fwd gate columns, rows H:2H (h_bwd) only bwd columns."""
    zeros = jnp.zeros_like(w_hh_fwd)
    return _pack_gate_cols(jnp.concatenate([w_hh_fwd, zeros], axis=1),
                           jnp.concatenate([zeros, w_hh_bwd], axis=1))


# ----------------------------- parameter init --------------------------------------
def init_raw_params(key):
    """PyTorch-layout parameters (used by the pure-JAX reference and for packing)."""
    num_dirs = 2 if BIDIRECTIONAL else 1
    params = {}
    key, k_emb = jax.random.split(key)
    params["embedding"] = 0.1 * jax.random.normal(
        k_emb, (VOCAB_SIZE, EMB_DIM), jnp.float32)

    lstm = {}
    for layer in range(N_LAYERS):
        in_dim = EMB_DIM if layer == 0 else HIDDEN_DIM * num_dirs
        for d in range(num_dirs):
            key, k1, k2, k3, k4 = jax.random.split(key, 5)
            w_ih = 0.1 * jax.random.normal(k1, (4 * HIDDEN_DIM, in_dim), jnp.float32)
            w_hh = 0.1 * jax.random.normal(k2, (4 * HIDDEN_DIM, HIDDEN_DIM), jnp.float32)
            b_ih = 0.1 * jax.random.normal(k3, (4 * HIDDEN_DIM,), jnp.float32)
            b_hh = 0.1 * jax.random.normal(k4, (4 * HIDDEN_DIM,), jnp.float32)
            lstm[(layer, d)] = (w_ih, w_hh, b_ih + b_hh)   # PyTorch gate order i,f,g,o
    params["lstm"] = lstm

    key, kf1, kf2 = jax.random.split(key, 3)
    fc_in = HIDDEN_DIM * num_dirs
    params["fc_w"] = 0.1 * jax.random.normal(kf1, (OUTPUT_DIM, fc_in), jnp.float32)
    params["fc_b"] = 0.1 * jax.random.normal(kf2, (OUTPUT_DIM,), jnp.float32)
    return params


def pack_params(raw):
    """Pack into kernel layout. Matmul operands (weights) stored as bf16; biases f32."""
    lstm = raw["lstm"]
    w_ih0f, w_hh0f, b0f = lstm[(0, 0)]
    w_ih0b, w_hh0b, b0b = lstm[(0, 1)]
    w_ih1f, w_hh1f, b1f = lstm[(1, 0)]
    w_ih1b, w_hh1b, b1b = lstm[(1, 1)]

    bf16 = lambda a: a.astype(jnp.bfloat16)
    two_h = 2 * HIDDEN_DIM

    fc_w_pad = jnp.zeros((two_h, FC_PAD), jnp.float32).at[:, :OUTPUT_DIM].set(raw["fc_w"].T)
    fc_b_pad = jnp.zeros((1, FC_PAD), jnp.float32).at[0, :OUTPUT_DIM].set(raw["fc_b"])

    return {
        "embedding": raw["embedding"],
        "wih0": bf16(_pack_gate_cols(w_ih0f, w_ih0b)),    # (E, 8H)   = (32, 256) bf16
        "whh0": bf16(_pack_recurrent(w_hh0f, w_hh0b)),    # (2H, 8H)  = (64, 256) bf16
        "b0": _pack_gate_bias(b0f, b0b),                  # (1, 8H)   f32
        "wih1": bf16(_pack_gate_cols(w_ih1f, w_ih1b)),    # (2H, 8H)  bf16
        "whh1": bf16(_pack_recurrent(w_hh1f, w_hh1b)),    # (2H, 8H)  bf16
        "b1": _pack_gate_bias(b1f, b1b),                  # (1, 8H)   f32
        "fc_w_t": bf16(fc_w_pad),                         # (2H, 128) bf16 (zero-padded)
        "fc_b": fc_b_pad,                                 # (1, 128)  f32
    }


# ----------------------------- forward (eval mode) --------------------------------
@jax.jit
def rnn_forward(packed, text):
    """text: (S, B) int32 -> logits (B, OUTPUT_DIM). Dropout is identity (eval)."""
    # TODO(synk): nn.Dropout is only active in training; eval-mode forward -> identity.
    S, B = text.shape
    Bp = max(BATCH_PAD, ((B + 7) // 8) * 8)          # pad batch to sublane granule
    x = packed["embedding"][text]                    # embedding gather = glue (S, B, E)
    x = jnp.pad(x, ((0, 0), (0, Bp - B), (0, 0)))    # (S, Bp, E), zero-padded rows
    x = x.reshape(S * Bp, EMB_DIM).astype(jnp.bfloat16)

    kernel = functools.partial(_fused_rnn_kernel, seq_len=S, batch_pad=Bp,
                               hidden=HIDDEN_DIM)
    args = (x, packed["wih0"], packed["whh0"], packed["b0"],
            packed["wih1"], packed["whh1"], packed["b1"],
            packed["fc_w_t"], packed["fc_b"])

    def full_spec(a):
        return pl.BlockSpec(a.shape, lambda *_: (0,) * a.ndim)

    out = pl.pallas_call(
        kernel,
        out_shape=jax.ShapeDtypeStruct((Bp, FC_PAD), jnp.float32),
        in_specs=[full_spec(a) for a in args],
        out_specs=pl.BlockSpec((Bp, FC_PAD), lambda *_: (0, 0)),
    )(*args)
    return out[:B, :OUTPUT_DIM]


# ----------------------------- pure-JAX reference ----------------------------------
def reference_forward(raw, text, matmul_dtype=jnp.float32):
    """Unfused reference mirroring torch.nn.LSTM(bidirectional) + fc, eval mode.
    matmul_dtype=bf16 gives a precision-matched reference for the kernel's bf16 dots."""
    H = HIDDEN_DIM
    num_dirs = 2 if BIDIRECTIONAL else 1

    def mm(a, b):
        return jnp.dot(a.astype(matmul_dtype), b.astype(matmul_dtype),
                       preferred_element_type=jnp.float32, precision="highest")

    x = raw["embedding"][text]                     # (S, B, E)
    finals = []
    for layer in range(N_LAYERS):
        outs, finals = [], []
        for d in range(num_dirs):
            w_ih, w_hh, b = raw["lstm"][(layer, d)]
            xs = x[::-1] if d == 1 else x
            h = jnp.zeros((x.shape[1], H), jnp.float32)
            c = jnp.zeros_like(h)
            hs = []
            for t in range(x.shape[0]):
                gates = mm(xs[t], w_ih.T) + mm(h, w_hh.T) + b
                i = jax.nn.sigmoid(gates[:, 0:H])
                f = jax.nn.sigmoid(gates[:, H:2 * H])
                g = jnp.tanh(gates[:, 2 * H:3 * H])
                o = jax.nn.sigmoid(gates[:, 3 * H:4 * H])
                c = f * c + i * g
                h = o * jnp.tanh(c)
                hs.append(h)
            out = jnp.stack(hs)
            finals.append(h)
            if d == 1:
                out = out[::-1]
            outs.append(out)
        x = jnp.concatenate(outs, axis=-1)
    hidden = jnp.concatenate(finals, axis=-1)      # [fwd_final | bwd_final] of last layer
    return mm(hidden, raw["fc_w"].T) + raw["fc_b"]


if __name__ == "__main__":
    key = jax.random.PRNGKey(0)
    k_param, k_text = jax.random.split(key)
    raw = init_raw_params(k_param)
    packed = pack_params(raw)
    text = jax.random.randint(k_text, (SEQ_LEN, BATCH), 0, VOCAB_SIZE, dtype=jnp.int32)

    logits = rnn_forward(packed, text)
    jax.block_until_ready(logits)
    assert logits.shape == (BATCH, OUTPUT_DIM), logits.shape

    # Tight correctness gate vs a precision-matched reference (bf16 operands, f32 accum):
    # catches packing / gate-order / direction bugs (which would produce O(1e-1) errors).
    ref_bf16 = reference_forward(raw, text, matmul_dtype=jnp.bfloat16)
    err_tight = float(jnp.max(jnp.abs(logits - ref_bf16)))
    assert err_tight < 2e-4, f"kernel vs bf16-matched reference: max abs err = {err_tight}"

    # Loose sanity bound vs the full-f32 reference (bounds bf16 operand rounding only).
    ref_f32 = reference_forward(raw, text, matmul_dtype=jnp.float32)
    err_f32 = float(jnp.max(jnp.abs(logits - ref_f32)))
    assert err_f32 < 3e-2, f"kernel vs f32 reference: max abs err = {err_f32}"

    print("KERNEL_OK")
</pallas_src>

<mosaic_0001>
module attributes {stable_mosaic.version = 11 : i64} {
  func.func @_fused_rnn_kernel(%arg0: memref<64x32xbf16, #tpu.memory_space<vmem>>, %arg1: memref<32x256xbf16, #tpu.memory_space<vmem>>, %arg2: memref<64x256xbf16, #tpu.memory_space<vmem>>, %arg3: memref<1x256xf32, #tpu.memory_space<vmem>>, %arg4: memref<64x256xbf16, #tpu.memory_space<vmem>>, %arg5: memref<64x256xbf16, #tpu.memory_space<vmem>>, %arg6: memref<1x256xf32, #tpu.memory_space<vmem>>, %arg7: memref<64x128xbf16, #tpu.memory_space<vmem>>, %arg8: memref<1x128xf32, #tpu.memory_space<vmem>>, %arg9: memref<8x128xf32, #tpu.memory_space<vmem>>) attributes {dimension_semantics = [], scalar_prefetch = 0 : i64, scratch_operands = 0 : i64, tpu.core_type = #tpu.core_type<tc>} {
    %0 = tpu.iota {dimensions = array<i32: 1>} : vector<1x256xi32>
    %c64_i32 = arith.constant 64 : i32
    %c0_i32 = arith.constant 0 : i32
    %1 = arith.cmpi eq, %c64_i32, %c0_i32 : i32
    %c1_i32 = arith.constant 1 : i32
    %2 = arith.select %1, %c1_i32, %c64_i32 : i32
    %3 = vector.broadcast %2 : i32 to vector<1x256xi32>
    %4 = arith.remsi %0, %3 : vector<1x256xi32>
    %c0_i32_0 = arith.constant 0 : i32
    %5 = vector.broadcast %c0_i32_0 : i32 to vector<1x256xi32>
    %6 = arith.cmpi ne, %4, %5 : vector<1x256xi32>
    %c0_i32_1 = arith.constant 0 : i32
    %7 = vector.broadcast %c0_i32_1 : i32 to vector<1x256xi32>
    %8 = arith.cmpi slt, %4, %7 : vector<1x256xi32>
    %c0_i32_2 = arith.constant 0 : i32
    %9 = arith.cmpi slt, %2, %c0_i32_2 : i32
    %10 = vector.broadcast %9 : i1 to vector<1x256xi1>
    %11 = vector.broadcast %10 : vector<1x256xi1> to vector<1x256xi1>
    %12 = arith.xori %8, %11 : vector<1x256xi1>
    %13 = arith.andi %12, %6 : vector<1x256xi1>
    %14 = vector.broadcast %2 : i32 to vector<1x256xi32>
    %15 = arith.addi %4, %14 : vector<1x256xi32>
    %16 = arith.select %13, %15, %4 : vector<1x256xi1>, vector<1x256xi32>
    %c32_i32 = arith.constant 32 : i32
    %17 = vector.broadcast %c32_i32 : i32 to vector<1x256xi32>
    %18 = arith.cmpi slt, %16, %17 : vector<1x256xi32>
    %19 = tpu.iota {dimensions = array<i32: 1>} : vector<1x64xi32>
    %c32_i32_3 = arith.constant 32 : i32
    %20 = vector.broadcast %c32_i32_3 : i32 to vector<1x64xi32>
    %21 = arith.cmpi slt, %19, %20 : vector<1x64xi32>
    %c0 = arith.constant 0 : index
    %c0_4 = arith.constant 0 : index
    %22 = vector.load %arg2[%c0, %c0_4] : memref<64x256xbf16, #tpu.memory_space<vmem>>, vector<64x256xbf16>
    %c0_5 = arith.constant 0 : index
    %c0_6 = arith.constant 0 : index
    %23 = vector.load %arg5[%c0_5, %c0_6] : memref<64x256xbf16, #tpu.memory_space<vmem>>, vector<64x256xbf16>
    %c0_7 = arith.constant 0 : index
    %c0_8 = arith.constant 0 : index
    %24 = vector.load %arg0[%c0_7, %c0_8] : memref<64x32xbf16, #tpu.memory_space<vmem>>, vector<64x32xbf16>
    %c0_9 = arith.constant 0 : index
    %c0_10 = arith.constant 0 : index
    %25 = vector.load %arg1[%c0_9, %c0_10] : memref<32x256xbf16, #tpu.memory_space<vmem>>, vector<32x256xbf16>
    %cst = arith.constant dense<0.000000e+00> : vector<64x256xf32>
    %26 = tpu.matmul %24, %25, %cst {dimension_numbers = #tpu.dot_dimension_numbers<[1], [0], [0], [1], [0, 0, 1, 1], [], []>} : vector<64x32xbf16>, vector<32x256xbf16>, vector<64x256xf32> -> vector<64x256xf32>
    %c0_11 = arith.constant 0 : index
    %c0_12 = arith.constant 0 : index
    %27 = vector.load %arg3[%c0_11, %c0_12] : memref<1x256xf32, #tpu.memory_space<vmem>>, vector<1x256xf32>
    %28 = vector.broadcast %27 : vector<1x256xf32> to vector<64x256xf32>
    %29 = arith.addf %26, %28 : vector<64x256xf32>
    %30 = vector.extract_strided_slice %29 {offsets = [0, 0], sizes = [8, 256], strides = [1, 1]} : vector<64x256xf32> to vector<8x256xf32>
    %31 = vector.extract_strided_slice %29 {offsets = [56, 0], sizes = [8, 256], strides = [1, 1]} : vector<64x256xf32> to vector<8x256xf32>
    %32 = vector.shape_cast %18 : vector<1x256xi1> to vector<1x256xi1>
    %33 = vector.broadcast %32 : vector<1x256xi1> to vector<8x256xi1>
    %34 = arith.select %33, %30, %31 : vector<8x256xi1>, vector<8x256xf32>
    %35 = vector.extract_strided_slice %29 {offsets = [8, 0], sizes = [8, 256], strides = [1, 1]} : vector<64x256xf32> to vector<8x256xf32>
    %36 = vector.extract_strided_slice %29 {offsets = [48, 0], sizes = [8, 256], strides = [1, 1]} : vector<64x256xf32> to vector<8x256xf32>
    %37 = vector.shape_cast %18 : vector<1x256xi1> to vector<1x256xi1>
    %38 = vector.broadcast %37 : vector<1x256xi1> to vector<8x256xi1>
    %39 = arith.select %38, %35, %36 : vector<8x256xi1>, vector<8x256xf32>
    %40 = vector.extract_strided_slice %29 {offsets = [16, 0], sizes = [8, 256], strides = [1, 1]} : vector<64x256xf32> to vector<8x256xf32>
    %41 = vector.extract_strided_slice %29 {offsets = [40, 0], sizes = [8, 256], strides = [1, 1]} : vector<64x256xf32> to vector<8x256xf32>
    %42 = vector.shape_cast %18 : vector<1x256xi1> to vector<1x256xi1>
    %43 = vector.broadcast %42 : vector<1x256xi1> to vector<8x256xi1>
    %44 = arith.select %43, %40, %41 : vector<8x256xi1>, vector<8x256xf32>
    %45 = vector.extract_strided_slice %29 {offsets = [24, 0], sizes = [8, 256], strides = [1, 1]} : vector<64x256xf32> to vector<8x256xf32>
    %46 = vector.extract_strided_slice %29 {offsets = [32, 0], sizes = [8, 256], strides = [1, 1]} : vector<64x256xf32> to vector<8x256xf32>
    %47 = vector.shape_cast %18 : vector<1x256xi1> to vector<1x256xi1>
    %48 = vector.broadcast %47 : vector<1x256xi1> to vector<8x256xi1>
    %49 = arith.select %48, %45, %46 : vector<8x256xi1>, vector<8x256xf32>
    %50 = vector.extract_strided_slice %29 {offsets = [32, 0], sizes = [8, 256], strides = [1, 1]} : vector<64x256xf32> to vector<8x256xf32>
    %51 = vector.extract_strided_slice %29 {offsets = [24, 0], sizes = [8, 256], strides = [1, 1]} : vector<64x256xf32> to vector<8x256xf32>
    %52 = vector.shape_cast %18 : vector<1x256xi1> to vector<1x256xi1>
    %53 = vector.broadcast %52 : vector<1x256xi1> to vector<8x256xi1>
    %54 = arith.select %53, %50, %51 : vector<8x256xi1>, vector<8x256xf32>
    %55 = vector.extract_strided_slice %29 {offsets = [40, 0], sizes = [8, 256], strides = [1, 1]} : vector<64x256xf32> to vector<8x256xf32>
    %56 = vector.extract_strided_slice %29 {offsets = [16, 0], sizes = [8, 256], strides = [1, 1]} : vector<64x256xf32> to vector<8x256xf32>
    %57 = vector.shape_cast %18 : vector<1x256xi1> to vector<1x256xi1>
    %58 = vector.broadcast %57 : vector<1x256xi1> to vector<8x256xi1>
    %59 = arith.select %58, %55, %56 : vector<8x256xi1>, vector<8x256xf32>
    %60 = vector.extract_strided_slice %29 {offsets = [48, 0], sizes = [8, 256], strides = [1, 1]} : vector<64x256xf32> to vector<8x256xf32>
    %61 = vector.extract_strided_slice %29 {offsets = [8, 0], sizes = [8, 256], strides = [1, 1]} : vector<64x256xf32> to vector<8x256xf32>
    %62 = vector.shape_cast %18 : vector<1x256xi1> to vector<1x256xi1>
    %63 = vector.broadcast %62 : vector<1x256xi1> to vector<8x256xi1>
    %64 = arith.select %63, %60, %61 : vector<8x256xi1>, vector<8x256xf32>
    %65 = vector.extract_strided_slice %29 {offsets = [56, 0], sizes = [8, 256], strides = [1, 1]} : vector<64x256xf32> to vector<8x256xf32>
    %66 = vector.extract_strided_slice %29 {offsets = [0, 0], sizes = [8, 256], strides = [1, 1]} : vector<64x256xf32> to vector<8x256xf32>
    %67 = vector.shape_cast %18 : vector<1x256xi1> to vector<1x256xi1>
    %68 = vector.broadcast %67 : vector<1x256xi1> to vector<8x256xi1>
    %69 = arith.select %68, %65, %66 : vector<8x256xi1>, vector<8x256xf32>
    %cst_13 = arith.constant 0.000000e+00 : f32
    %70 = vector.broadcast %cst_13 : f32 to vector<8x64xf32>
    %cst_14 = arith.constant 0.000000e+00 : f32
    %71 = vector.broadcast %cst_14 : f32 to vector<8x64xf32>
    %72 = arith.truncf %70 : vector<8x64xf32> to vector<8x64xbf16>
    %cst_15 = arith.constant dense<0.000000e+00> : vector<8x256xf32>
    %73 = tpu.matmul %72, %22, %cst_15 {dimension_numbers = #tpu.dot_dimension_numbers<[1], [0], [0], [1], [0, 0, 1, 1], [], []>} : vector<8x64xbf16>, vector<64x256xbf16>, vector<8x256xf32> -> vector<8x256xf32>
    %74 = arith.addf %34, %73 : vector<8x256xf32>
    %75 = vector.extract_strided_slice %74 {offsets = [0, 0], sizes = [8, 64], strides = [1, 1]} : vector<8x256xf32> to vector<8x64xf32>
    %76 = arith.negf %75 : vector<8x64xf32>
    %77 = math.exp %76 : vector<8x64xf32>
    %cst_16 = arith.constant 1.000000e+00 : f32
    %78 = vector.broadcast %cst_16 : f32 to vector<8x64xf32>
    %79 = arith.addf %78, %77 : vector<8x64xf32>
    %80 = arith.divf %78, %79 : vector<8x64xf32>
    %81 = vector.extract_strided_slice %74 {offsets = [0, 64], sizes = [8, 64], strides = [1, 1]} : vector<8x256xf32> to vector<8x64xf32>
    %82 = arith.negf %81 : vector<8x64xf32>
    %83 = math.exp %82 : vector<8x64xf32>
    %cst_17 = arith.constant 1.000000e+00 : f32
    %84 = vector.broadcast %cst_17 : f32 to vector<8x64xf32>
    %85 = arith.addf %84, %83 : vector<8x64xf32>
    %86 = arith.divf %84, %85 : vector<8x64xf32>
    %87 = vector.extract_strided_slice %74 {offsets = [0, 128], sizes = [8, 64], strides = [1, 1]} : vector<8x256xf32> to vector<8x64xf32>
    %88 = math.tanh %87 : vector<8x64xf32>
    %89 = vector.extract_strided_slice %74 {offsets = [0, 192], sizes = [8, 64], strides = [1, 1]} : vector<8x256xf32> to vector<8x64xf32>
    %90 = arith.negf %89 : vector<8x64xf32>
    %91 = math.exp %90 : vector<8x64xf32>
    %cst_18 = arith.constant 1.000000e+00 : f32
    %92 = vector.broadcast %cst_18 : f32 to vector<8x64xf32>
    %93 = arith.addf %92, %91 : vector<8x64xf32>
    %94 = arith.divf %92, %93 : vector<8x64xf32>
    %95 = arith.mulf %86, %71 : vector<8x64xf32>
    %96 = arith.mulf %80, %88 : vector<8x64xf32>
    %97 = arith.addf %95, %96 : vector<8x64xf32>
    %98 = math.tanh %97 : vector<8x64xf32>
    %99 = arith.mulf %94, %98 : vector<8x64xf32>
    %100 = arith.truncf %99 : vector<8x64xf32> to vector<8x64xbf16>
    %cst_19 = arith.constant dense<0.000000e+00> : vector<8x256xf32>
    %101 = tpu.matmul %100, %22, %cst_19 {dimension_numbers = #tpu.dot_dimension_numbers<[1], [0], [0], [1], [0, 0, 1, 1], [], []>} : vector<8x64xbf16>, vector<64x256xbf16>, vector<8x256xf32> -> vector<8x256xf32>
    %102 = arith.addf %39, %101 : vector<8x256xf32>
    %103 = vector.extract_strided_slice %102 {offsets = [0, 0], sizes = [8, 64], strides = [1, 1]} : vector<8x256xf32> to vector<8x64xf32>
    %104 = arith.negf %103 : vector<8x64xf32>
    %105 = math.exp %104 : vector<8x64xf32>
    %cst_20 = arith.constant 1.000000e+00 : f32
    %106 = vector.broadcast %cst_20 : f32 to vector<8x64xf32>
    %107 = arith.addf %106, %105 : vector<8x64xf32>
    %108 = arith.divf %106, %107 : vector<8x64xf32>
    %109 = vector.extract_strided_slice %102 {offsets = [0, 64], sizes = [8, 64], strides = [1, 1]} : vector<8x256xf32> to vector<8x64xf32>
    %110 = arith.negf %109 : vector<8x64xf32>
    %111 = math.exp %110 : vector<8x64xf32>
    %cst_21 = arith.constant 1.000000e+00 : f32
    %112 = vector.broadcast %cst_21 : f32 to vector<8x64xf32>
    %113 = arith.addf %112, %111 : vector<8x64xf32>
    %114 = arith.divf %112, %113 : vector<8x64xf32>
    %115 = vector.extract_strided_slice %102 {offsets = [0, 128], sizes = [8, 64], strides = [1, 1]} : vector<8x256xf32> to vector<8x64xf32>
    %116 = math.tanh %115 : vector<8x64xf32>
    %117 = vector.extract_strided_slice %102 {offsets = [0, 192], sizes = [8, 64], strides = [1, 1]} : vector<8x256xf32> to vector<8x64xf32>
    %118 = arith.negf %117 : vector<8x64xf32>
    %119 = math.exp %118 : vector<8x64xf32>
    %cst_22 = arith.constant 1.000000e+00 : f32
    %120 = vector.broadcast %cst_22 : f32 to vector<8x64xf32>
    %121 = arith.addf %120, %119 : vector<8x64xf32>
    %122 = arith.divf %120, %121 : vector<8x64xf32>
    %123 = arith.mulf %114, %97 : vector<8x64xf32>
    %124 = arith.mulf %108, %116 : vector<8x64xf32>
    %125 = arith.addf %123, %124 : vector<8x64xf32>
    %126 = math.tanh %125 : vector<8x64xf32>
    %127 = arith.mulf %122, %126 : vector<8x64xf32>
    %128 = arith.truncf %127 : vector<8x64xf32> to vector<8x64xbf16>
    %cst_23 = arith.constant dense<0.000000e+00> : vector<8x256xf32>
    %129 = tpu.matmul %128, %22, %cst_23 {dimension_numbers = #tpu.dot_dimension_numbers<[1], [0], [0], [1], [0, 0, 1, 1], [], []>} : vector<8x64xbf16>, vector<64x256xbf16>, vector<8x256xf32> -> vector<8x256xf32>
    %130 = arith.addf %44, %129 : vector<8x256xf32>
    %131 = vector.extract_strided_slice %130 {offsets = [0, 0], sizes = [8, 64], strides = [1, 1]} : vector<8x256xf32> to vector<8x64xf32>
    %132 = arith.negf %131 : vector<8x64xf32>
    %133 = math.exp %132 : vector<8x64xf32>
    %cst_24 = arith.constant 1.000000e+00 : f32
    %134 = vector.broadcast %cst_24 : f32 to vector<8x64xf32>
    %135 = arith.addf %134, %133 : vector<8x64xf32>
    %136 = arith.divf %134, %135 : vector<8x64xf32>
    %137 = vector.extract_strided_slice %130 {offsets = [0, 64], sizes = [8, 64], strides = [1, 1]} : vector<8x256xf32> to vector<8x64xf32>
    %138 = arith.negf %137 : vector<8x64xf32>
    %139 = math.exp %138 : vector<8x64xf32>
    %cst_25 = arith.constant 1.000000e+00 : f32
    %140 = vector.broadcast %cst_25 : f32 to vector<8x64xf32>
    %141 = arith.addf %140, %139 : vector<8x64xf32>
    %142 = arith.divf %140, %141 : vector<8x64xf32>
    %143 = vector.extract_strided_slice %130 {offsets = [0, 128], sizes = [8, 64], strides = [1, 1]} : vector<8x256xf32> to vector<8x64xf32>
    %144 = math.tanh %143 : vector<8x64xf32>
    %145 = vector.extract_strided_slice %130 {offsets = [0, 192], sizes = [8, 64], strides = [1, 1]} : vector<8x256xf32> to vector<8x64xf32>
    %146 = arith.negf %145 : vector<8x64xf32>
    %147 = math.exp %146 : vector<8x64xf32>
    %cst_26 = arith.constant 1.000000e+00 : f32
    %148 = vector.broadcast %cst_26 : f32 to vector<8x64xf32>
    %149 = arith.addf %148, %147 : vector<8x64xf32>
    %150 = arith.divf %148, %149 : vector<8x64xf32>
    %151 = arith.mulf %142, %125 : vector<8x64xf32>
    %152 = arith.mulf %136, %144 : vector<8x64xf32>
    %153 = arith.addf %151, %152 : vector<8x64xf32>
    %154 = math.tanh %153 : vector<8x64xf32>
    %155 = arith.mulf %150, %154 : vector<8x64xf32>
    %156 = arith.truncf %155 : vector<8x64xf32> to vector<8x64xbf16>
    %cst_27 = arith.constant dense<0.000000e+00> : vector<8x256xf32>
    %157 = tpu.matmul %156, %22, %cst_27 {dimension_numbers = #tpu.dot_dimension_numbers<[1], [0], [0], [1], [0, 0, 1, 1], [], []>} : vector<8x64xbf16>, vector<64x256xbf16>, vector<8x256xf32> -> vector<8x256xf32>
    %158 = arith.addf %49, %157 : vector<8x256xf32>
    %159 = vector.extract_strided_slice %158 {offsets = [0, 0], sizes = [8, 64], strides = [1, 1]} : vector<8x256xf32> to vector<8x64xf32>
    %160 = arith.negf %159 : vector<8x64xf32>
    %161 = math.exp %160 : vector<8x64xf32>
    %cst_28 = arith.constant 1.000000e+00 : f32
    %162 = vector.broadcast %cst_28 : f32 to vector<8x64xf32>
    %163 = arith.addf %162, %161 : vector<8x64xf32>
    %164 = arith.divf %162, %163 : vector<8x64xf32>
    %165 = vector.extract_strided_slice %158 {offsets = [0, 64], sizes = [8, 64], strides = [1, 1]} : vector<8x256xf32> to vector<8x64xf32>
    %166 = arith.negf %165 : vector<8x64xf32>
    %167 = math.exp %166 : vector<8x64xf32>
    %cst_29 = arith.constant 1.000000e+00 : f32
    %168 = vector.broadcast %cst_29 : f32 to vector<8x64xf32>
    %169 = arith.addf %168, %167 : vector<8x64xf32>
    %170 = arith.divf %168, %169 : vector<8x64xf32>
    %171 = vector.extract_strided_slice %158 {offsets = [0, 128], sizes = [8, 64], strides = [1, 1]} : vector<8x256xf32> to vector<8x64xf32>
    %172 = math.tanh %171 : vector<8x64xf32>
    %173 = vector.extract_strided_slice %158 {offsets = [0, 192], sizes = [8, 64], strides = [1, 1]} : vector<8x256xf32> to vector<8x64xf32>
    %174 = arith.negf %173 : vector<8x64xf32>
    %175 = math.exp %174 : vector<8x64xf32>
    %cst_30 = arith.constant 1.000000e+00 : f32
    %176 = vector.broadcast %cst_30 : f32 to vector<8x64xf32>
    %177 = arith.addf %176, %175 : vector<8x64xf32>
    %178 = arith.divf %176, %177 : vector<8x64xf32>
    %179 = arith.mulf %170, %153 : vector<8x64xf32>
    %180 = arith.mulf %164, %172 : vector<8x64xf32>
    %181 = arith.addf %179, %180 : vector<8x64xf32>
    %182 = math.tanh %181 : vector<8x64xf32>
    %183 = arith.mulf %178, %182 : vector<8x64xf32>
    %184 = arith.truncf %183 : vector<8x64xf32> to vector<8x64xbf16>
    %cst_31 = arith.constant dense<0.000000e+00> : vector<8x256xf32>
    %185 = tpu.matmul %184, %22, %cst_31 {dimension_numbers = #tpu.dot_dimension_numbers<[1], [0], [0], [1], [0, 0, 1, 1], [], []>} : vector<8x64xbf16>, vector<64x256xbf16>, vector<8x256xf32> -> vector<8x256xf32>
    %186 = arith.addf %54, %185 : vector<8x256xf32>
    %187 = vector.extract_strided_slice %186 {offsets = [0, 0], sizes = [8, 64], strides = [1, 1]} : vector<8x256xf32> to vector<8x64xf32>
    %188 = arith.negf %187 : vector<8x64xf32>
    %189 = math.exp %188 : vector<8x64xf32>
    %cst_32 = arith.constant 1.000000e+00 : f32
    %190 = vector.broadcast %cst_32 : f32 to vector<8x64xf32>
    %191 = arith.addf %190, %189 : vector<8x64xf32>
    %192 = arith.divf %190, %191 : vector<8x64xf32>
    %193 = vector.extract_strided_slice %186 {offsets = [0, 64], sizes = [8, 64], strides = [1, 1]} : vector<8x256xf32> to vector<8x64xf32>
    %194 = arith.negf %193 : vector<8x64xf32>
    %195 = math.exp %194 : vector<8x64xf32>
    %cst_33 = arith.constant 1.000000e+00 : f32
    %196 = vector.broadcast %cst_33 : f32 to vector<8x64xf32>
    %197 = arith.addf %196, %195 : vector<8x64xf32>
    %198 = arith.divf %196, %197 : vector<8x64xf32>
    %199 = vector.extract_strided_slice %186 {offsets = [0, 128], sizes = [8, 64], strides = [1, 1]} : vector<8x256xf32> to vector<8x64xf32>
    %200 = math.tanh %199 : vector<8x64xf32>
    %201 = vector.extract_strided_slice %186 {offsets = [0, 192], sizes = [8, 64], strides = [1, 1]} : vector<8x256xf32> to vector<8x64xf32>
    %202 = arith.negf %201 : vector<8x64xf32>
    %203 = math.exp %202 : vector<8x64xf32>
    %cst_34 = arith.constant 1.000000e+00 : f32
    %204 = vector.broadcast %cst_34 : f32 to vector<8x64xf32>
    %205 = arith.addf %204, %203 : vector<8x64xf32>
    %206 = arith.divf %204, %205 : vector<8x64xf32>
    %207 = arith.mulf %198, %181 : vector<8x64xf32>
    %208 = arith.mulf %192, %200 : vector<8x64xf32>
    %209 = arith.addf %207, %208 : vector<8x64xf32>
    %210 = math.tanh %209 : vector<8x64xf32>
    %211 = arith.mulf %206, %210 : vector<8x64xf32>
    %212 = arith.truncf %211 : vector<8x64xf32> to vector<8x64xbf16>
    %cst_35 = arith.constant dense<0.000000e+00> : vector<8x256xf32>
    %213 = tpu.matmul %212, %22, %cst_35 {dimension_numbers = #tpu.dot_dimension_numbers<[1], [0], [0], [1], [0, 0, 1, 1], [], []>} : vector<8x64xbf16>, vector<64x256xbf16>, vector<8x256xf32> -> vector<8x256xf32>
    %214 = arith.addf %59, %213 : vector<8x256xf32>
    %215 = vector.extract_strided_slice %214 {offsets = [0, 0], sizes = [8, 64], strides = [1, 1]} : vector<8x256xf32> to vector<8x64xf32>
    %216 = arith.negf %215 : vector<8x64xf32>
    %217 = math.exp %216 : vector<8x64xf32>
    %cst_36 = arith.constant 1.000000e+00 : f32
    %218 = vector.broadcast %cst_36 : f32 to vector<8x64xf32>
    %219 = arith.addf %218, %217 : vector<8x64xf32>
    %220 = arith.divf %218, %219 : vector<8x64xf32>
    %221 = vector.extract_strided_slice %214 {offsets = [0, 64], sizes = [8, 64], strides = [1, 1]} : vector<8x256xf32> to vector<8x64xf32>
    %222 = arith.negf %221 : vector<8x64xf32>
    %223 = math.exp %222 : vector<8x64xf32>
    %cst_37 = arith.constant 1.000000e+00 : f32
    %224 = vector.broadcast %cst_37 : f32 to vector<8x64xf32>
    %225 = arith.addf %224, %223 : vector<8x64xf32>
    %226 = arith.divf %224, %225 : vector<8x64xf32>
    %227 = vector.extract_strided_slice %214 {offsets = [0, 128], sizes = [8, 64], strides = [1, 1]} : vector<8x256xf32> to vector<8x64xf32>
    %228 = math.tanh %227 : vector<8x64xf32>
    %229 = vector.extract_strided_slice %214 {offsets = [0, 192], sizes = [8, 64], strides = [1, 1]} : vector<8x256xf32> to vector<8x64xf32>
    %230 = arith.negf %229 : vector<8x64xf32>
    %231 = math.exp %230 : vector<8x64xf32>
    %cst_38 = arith.constant 1.000000e+00 : f32
    %232 = vector.broadcast %cst_38 : f32 to vector<8x64xf32>
    %233 = arith.addf %232, %231 : vector<8x64xf32>
    %234 = arith.divf %232, %233 : vector<8x64xf32>
    %235 = arith.mulf %226, %209 : vector<8x64xf32>
    %236 = arith.mulf %220, %228 : vector<8x64xf32>
    %237 = arith.addf %235, %236 : vector<8x64xf32>
    %238 = math.tanh %237 : vector<8x64xf32>
    %239 = arith.mulf %234, %238 : vector<8x64xf32>
    %240 = arith.truncf %239 : vector<8x64xf32> to vector<8x64xbf16>
    %cst_39 = arith.constant dense<0.000000e+00> : vector<8x256xf32>
    %241 = tpu.matmul %240, %22, %cst_39 {dimension_numbers = #tpu.dot_dimension_numbers<[1], [0], [0], [1], [0, 0, 1, 1], [], []>} : vector<8x64xbf16>, vector<64x256xbf16>, vector<8x256xf32> -> vector<8x256xf32>
    %242 = arith.addf %64, %241 : vector<8x256xf32>
    %243 = vector.extract_strided_slice %242 {offsets = [0, 0], sizes = [8, 64], strides = [1, 1]} : vector<8x256xf32> to vector<8x64xf32>
    %244 = arith.negf %243 : vector<8x64xf32>
    %245 = math.exp %244 : vector<8x64xf32>
    %cst_40 = arith.constant 1.000000e+00 : f32
    %246 = vector.broadcast %cst_40 : f32 to vector<8x64xf32>
    %247 = arith.addf %246, %245 : vector<8x64xf32>
    %248 = arith.divf %246, %247 : vector<8x64xf32>
    %249 = vector.extract_strided_slice %242 {offsets = [0, 64], sizes = [8, 64], strides = [1, 1]} : vector<8x256xf32> to vector<8x64xf32>
    %250 = arith.negf %249 : vector<8x64xf32>
    %251 = math.exp %250 : vector<8x64xf32>
    %cst_41 = arith.constant 1.000000e+00 : f32
    %252 = vector.broadcast %cst_41 : f32 to vector<8x64xf32>
    %253 = arith.addf %252, %251 : vector<8x64xf32>
    %254 = arith.divf %252, %253 : vector<8x64xf32>
    %255 = vector.extract_strided_slice %242 {offsets = [0, 128], sizes = [8, 64], strides = [1, 1]} : vector<8x256xf32> to vector<8x64xf32>
    %256 = math.tanh %255 : vector<8x64xf32>
    %257 = vector.extract_strided_slice %242 {offsets = [0, 192], sizes = [8, 64], strides = [1, 1]} : vector<8x256xf32> to vector<8x64xf32>
    %258 = arith.negf %257 : vector<8x64xf32>
    %259 = math.exp %258 : vector<8x64xf32>
    %cst_42 = arith.constant 1.000000e+00 : f32
    %260 = vector.broadcast %cst_42 : f32 to vector<8x64xf32>
    %261 = arith.addf %260, %259 : vector<8x64xf32>
    %262 = arith.divf %260, %261 : vector<8x64xf32>
    %263 = arith.mulf %254, %237 : vector<8x64xf32>
    %264 = arith.mulf %248, %256 : vector<8x64xf32>
    %265 = arith.addf %263, %264 : vector<8x64xf32>
    %266 = math.tanh %265 : vector<8x64xf32>
    %267 = arith.mulf %262, %266 : vector<8x64xf32>
    %268 = arith.truncf %267 : vector<8x64xf32> to vector<8x64xbf16>
    %cst_43 = arith.constant dense<0.000000e+00> : vector<8x256xf32>
    %269 = tpu.matmul %268, %22, %cst_43 {dimension_numbers = #tpu.dot_dimension_numbers<[1], [0], [0], [1], [0, 0, 1, 1], [], []>} : vector<8x64xbf16>, vector<64x256xbf16>, vector<8x256xf32> -> vector<8x256xf32>
    %270 = arith.addf %69, %269 : vector<8x256xf32>
    %271 = vector.extract_strided_slice %270 {offsets = [0, 0], sizes = [8, 64], strides = [1, 1]} : vector<8x256xf32> to vector<8x64xf32>
    %272 = arith.negf %271 : vector<8x64xf32>
    %273 = math.exp %272 : vector<8x64xf32>
    %cst_44 = arith.constant 1.000000e+00 : f32
    %274 = vector.broadcast %cst_44 : f32 to vector<8x64xf32>
    %275 = arith.addf %274, %273 : vector<8x64xf32>
    %276 = arith.divf %274, %275 : vector<8x64xf32>
    %277 = vector.extract_strided_slice %270 {offsets = [0, 64], sizes = [8, 64], strides = [1, 1]} : vector<8x256xf32> to vector<8x64xf32>
    %278 = arith.negf %277 : vector<8x64xf32>
    %279 = math.exp %278 : vector<8x64xf32>
    %cst_45 = arith.constant 1.000000e+00 : f32
    %280 = vector.broadcast %cst_45 : f32 to vector<8x64xf32>
    %281 = arith.addf %280, %279 : vector<8x64xf32>
    %282 = arith.divf %280, %281 : vector<8x64xf32>
    %283 = vector.extract_strided_slice %270 {offsets = [0, 128], sizes = [8, 64], strides = [1, 1]} : vector<8x256xf32> to vector<8x64xf32>
    %284 = math.tanh %283 : vector<8x64xf32>
    %285 = vector.extract_strided_slice %270 {offsets = [0, 192], sizes = [8, 64], strides = [1, 1]} : vector<8x256xf32> to vector<8x64xf32>
    %286 = arith.negf %285 : vector<8x64xf32>
    %287 = math.exp %286 : vector<8x64xf32>
    %cst_46 = arith.constant 1.000000e+00 : f32
    %288 = vector.broadcast %cst_46 : f32 to vector<8x64xf32>
    %289 = arith.addf %288, %287 : vector<8x64xf32>
    %290 = arith.divf %288, %289 : vector<8x64xf32>
    %291 = arith.mulf %282, %265 : vector<8x64xf32>
    %292 = arith.mulf %276, %284 : vector<8x64xf32>
    %293 = arith.addf %291, %292 : vector<8x64xf32>
    %294 = math.tanh %293 : vector<8x64xf32>
    %295 = arith.mulf %290, %294 : vector<8x64xf32>
    %296 = vector.shape_cast %21 : vector<1x64xi1> to vector<1x64xi1>
    %297 = vector.broadcast %296 : vector<1x64xi1> to vector<8x64xi1>
    %298 = arith.select %297, %99, %295 : vector<8x64xi1>, vector<8x64xf32>
    %299 = vector.shape_cast %21 : vector<1x64xi1> to vector<1x64xi1>
    %300 = vector.broadcast %299 : vector<1x64xi1> to vector<8x64xi1>
    %301 = arith.select %300, %127, %267 : vector<8x64xi1>, vector<8x64xf32>
    %302 = vector.shape_cast %21 : vector<1x64xi1> to vector<1x64xi1>
    %303 = vector.broadcast %302 : vector<1x64xi1> to vector<8x64xi1>
    %304 = arith.select %303, %155, %239 : vector<8x64xi1>, vector<8x64xf32>
    %305 = vector.shape_cast %21 : vector<1x64xi1> to vector<1x64xi1>
    %306 = vector.broadcast %305 : vector<1x64xi1> to vector<8x64xi1>
    %307 = arith.select %306, %183, %211 : vector<8x64xi1>, vector<8x64xf32>
    %308 = vector.shape_cast %21 : vector<1x64xi1> to vector<1x64xi1>
    %309 = vector.broadcast %308 : vector<1x64xi1> to vector<8x64xi1>
    %310 = arith.select %309, %211, %183 : vector<8x64xi1>, vector<8x64xf32>
    %311 = vector.shape_cast %21 : vector<1x64xi1> to vector<1x64xi1>
    %312 = vector.broadcast %311 : vector<1x64xi1> to vector<8x64xi1>
    %313 = arith.select %312, %239, %155 : vector<8x64xi1>, vector<8x64xf32>
    %314 = vector.shape_cast %21 : vector<1x64xi1> to vector<1x64xi1>
    %315 = vector.broadcast %314 : vector<1x64xi1> to vector<8x64xi1>
    %316 = arith.select %315, %267, %127 : vector<8x64xi1>, vector<8x64xf32>
    %317 = vector.shape_cast %21 : vector<1x64xi1> to vector<1x64xi1>
    %318 = vector.broadcast %317 : vector<1x64xi1> to vector<8x64xi1>
    %319 = arith.select %318, %295, %99 : vector<8x64xi1>, vector<8x64xf32>
    %320 = tpu.concatenate %298, %301, %304, %307, %310, %313, %316, %319 in 0 : vector<8x64xf32>, vector<8x64xf32>, vector<8x64xf32>, vector<8x64xf32>, vector<8x64xf32>, vector<8x64xf32>, vector<8x64xf32>, vector<8x64xf32> -> vector<64x64xf32>
    %321 = arith.truncf %320 : vector<64x64xf32> to vector<64x64xbf16>
    %c0_47 = arith.constant 0 : index
    %c0_48 = arith.constant 0 : index
    %322 = vector.load %arg4[%c0_47, %c0_48] : memref<64x256xbf16, #tpu.memory_space<vmem>>, vector<64x256xbf16>
    %cst_49 = arith.constant dense<0.000000e+00> : vector<64x256xf32>
    %323 = tpu.matmul %321, %322, %cst_49 {dimension_numbers = #tpu.dot_dimension_numbers<[1], [0], [0], [1], [0, 0, 1, 1], [], []>} : vector<64x64xbf16>, vector<64x256xbf16>, vector<64x256xf32> -> vector<64x256xf32>
    %c0_50 = arith.constant 0 : index
    %c0_51 = arith.constant 0 : index
    %324 = vector.load %arg6[%c0_50, %c0_51] : memref<1x256xf32, #tpu.memory_space<vmem>>, vector<1x256xf32>
    %325 = vector.broadcast %324 : vector<1x256xf32> to vector<64x256xf32>
    %326 = arith.addf %323, %325 : vector<64x256xf32>
    %327 = vector.extract_strided_slice %326 {offsets = [0, 0], sizes = [8, 256], strides = [1, 1]} : vector<64x256xf32> to vector<8x256xf32>
    %328 = vector.extract_strided_slice %326 {offsets = [56, 0], sizes = [8, 256], strides = [1, 1]} : vector<64x256xf32> to vector<8x256xf32>
    %329 = vector.shape_cast %18 : vector<1x256xi1> to vector<1x256xi1>
    %330 = vector.broadcast %329 : vector<1x256xi1> to vector<8x256xi1>
    %331 = arith.select %330, %327, %328 : vector<8x256xi1>, vector<8x256xf32>
    %332 = vector.extract_strided_slice %326 {offsets = [8, 0], sizes = [8, 256], strides = [1, 1]} : vector<64x256xf32> to vector<8x256xf32>
    %333 = vector.extract_strided_slice %326 {offsets = [48, 0], sizes = [8, 256], strides = [1, 1]} : vector<64x256xf32> to vector<8x256xf32>
    %334 = vector.shape_cast %18 : vector<1x256xi1> to vector<1x256xi1>
    %335 = vector.broadcast %334 : vector<1x256xi1> to vector<8x256xi1>
    %336 = arith.select %335, %332, %333 : vector<8x256xi1>, vector<8x256xf32>
    %337 = vector.extract_strided_slice %326 {offsets = [16, 0], sizes = [8, 256], strides = [1, 1]} : vector<64x256xf32> to vector<8x256xf32>
    %338 = vector.extract_strided_slice %326 {offsets = [40, 0], sizes = [8, 256], strides = [1, 1]} : vector<64x256xf32> to vector<8x256xf32>
    %339 = vector.shape_cast %18 : vector<1x256xi1> to vector<1x256xi1>
    %340 = vector.broadcast %339 : vector<1x256xi1> to vector<8x256xi1>
    %341 = arith.select %340, %337, %338 : vector<8x256xi1>, vector<8x256xf32>
    %342 = vector.extract_strided_slice %326 {offsets = [24, 0], sizes = [8, 256], strides = [1, 1]} : vector<64x256xf32> to vector<8x256xf32>
    %343 = vector.extract_strided_slice %326 {offsets = [32, 0], sizes = [8, 256], strides = [1, 1]} : vector<64x256xf32> to vector<8x256xf32>
    %344 = vector.shape_cast %18 : vector<1x256xi1> to vector<1x256xi1>
    %345 = vector.broadcast %344 : vector<1x256xi1> to vector<8x256xi1>
    %346 = arith.select %345, %342, %343 : vector<8x256xi1>, vector<8x256xf32>
    %347 = vector.extract_strided_slice %326 {offsets = [32, 0], sizes = [8, 256], strides = [1, 1]} : vector<64x256xf32> to vector<8x256xf32>
    %348 = vector.extract_strided_slice %326 {offsets = [24, 0], sizes = [8, 256], strides = [1, 1]} : vector<64x256xf32> to vector<8x256xf32>
    %349 = vector.shape_cast %18 : vector<1x256xi1> to vector<1x256xi1>
    %350 = vector.broadcast %349 : vector<1x256xi1> to vector<8x256xi1>
    %351 = arith.select %350, %347, %348 : vector<8x256xi1>, vector<8x256xf32>
    %352 = vector.extract_strided_slice %326 {offsets = [40, 0], sizes = [8, 256], strides = [1, 1]} : vector<64x256xf32> to vector<8x256xf32>
    %353 = vector.extract_strided_slice %326 {offsets = [16, 0], sizes = [8, 256], strides = [1, 1]} : vector<64x256xf32> to vector<8x256xf32>
    %354 = vector.shape_cast %18 : vector<1x256xi1> to vector<1x256xi1>
    %355 = vector.broadcast %354 : vector<1x256xi1> to vector<8x256xi1>
    %356 = arith.select %355, %352, %353 : vector<8x256xi1>, vector<8x256xf32>
    %357 = vector.extract_strided_slice %326 {offsets = [48, 0], sizes = [8, 256], strides = [1, 1]} : vector<64x256xf32> to vector<8x256xf32>
    %358 = vector.extract_strided_slice %326 {offsets = [8, 0], sizes = [8, 256], strides = [1, 1]} : vector<64x256xf32> to vector<8x256xf32>
    %359 = vector.shape_cast %18 : vector<1x256xi1> to vector<1x256xi1>
    %360 = vector.broadcast %359 : vector<1x256xi1> to vector<8x256xi1>
    %361 = arith.select %360, %357, %358 : vector<8x256xi1>, vector<8x256xf32>
    %362 = vector.extract_strided_slice %326 {offsets = [56, 0], sizes = [8, 256], strides = [1, 1]} : vector<64x256xf32> to vector<8x256xf32>
    %363 = vector.extract_strided_slice %326 {offsets = [0, 0], sizes = [8, 256], strides = [1, 1]} : vector<64x256xf32> to vector<8x256xf32>
    %364 = vector.shape_cast %18 : vector<1x256xi1> to vector<1x256xi1>
    %365 = vector.broadcast %364 : vector<1x256xi1> to vector<8x256xi1>
    %366 = arith.select %365, %362, %363 : vector<8x256xi1>, vector<8x256xf32>
    %cst_52 = arith.constant 0.000000e+00 : f32
    %367 = vector.broadcast %cst_52 : f32 to vector<8x64xf32>
    %cst_53 = arith.constant 0.000000e+00 : f32
    %368 = vector.broadcast %cst_53 : f32 to vector<8x64xf32>
    %369 = arith.truncf %367 : vector<8x64xf32> to vector<8x64xbf16>
    %cst_54 = arith.constant dense<0.000000e+00> : vector<8x256xf32>
    %370 = tpu.matmul %369, %23, %cst_54 {dimension_numbers = #tpu.dot_dimension_numbers<[1], [0], [0], [1], [0, 0, 1, 1], [], []>} : vector<8x64xbf16>, vector<64x256xbf16>, vector<8x256xf32> -> vector<8x256xf32>
    %371 = arith.addf %331, %370 : vector<8x256xf32>
    %372 = vector.extract_strided_slice %371 {offsets = [0, 0], sizes = [8, 64], strides = [1, 1]} : vector<8x256xf32> to vector<8x64xf32>
    %373 = arith.negf %372 : vector<8x64xf32>
    %374 = math.exp %373 : vector<8x64xf32>
    %cst_55 = arith.constant 1.000000e+00 : f32
    %375 = vector.broadcast %cst_55 : f32 to vector<8x64xf32>
    %376 = arith.addf %375, %374 : vector<8x64xf32>
    %377 = arith.divf %375, %376 : vector<8x64xf32>
    %378 = vector.extract_strided_slice %371 {offsets = [0, 64], sizes = [8, 64], strides = [1, 1]} : vector<8x256xf32> to vector<8x64xf32>
    %379 = arith.negf %378 : vector<8x64xf32>
    %380 = math.exp %379 : vector<8x64xf32>
    %cst_56 = arith.constant 1.000000e+00 : f32
    %381 = vector.broadcast %cst_56 : f32 to vector<8x64xf32>
    %382 = arith.addf %381, %380 : vector<8x64xf32>
    %383 = arith.divf %381, %382 : vector<8x64xf32>
    %384 = vector.extract_strided_slice %371 {offsets = [0, 128], sizes = [8, 64], strides = [1, 1]} : vector<8x256xf32> to vector<8x64xf32>
    %385 = math.tanh %384 : vector<8x64xf32>
    %386 = vector.extract_strided_slice %371 {offsets = [0, 192], sizes = [8, 64], strides = [1, 1]} : vector<8x256xf32> to vector<8x64xf32>
    %387 = arith.negf %386 : vector<8x64xf32>
    %388 = math.exp %387 : vector<8x64xf32>
    %cst_57 = arith.constant 1.000000e+00 : f32
    %389 = vector.broadcast %cst_57 : f32 to vector<8x64xf32>
    %390 = arith.addf %389, %388 : vector<8x64xf32>
    %391 = arith.divf %389, %390 : vector<8x64xf32>
    %392 = arith.mulf %383, %368 : vector<8x64xf32>
    %393 = arith.mulf %377, %385 : vector<8x64xf32>
    %394 = arith.addf %392, %393 : vector<8x64xf32>
    %395 = math.tanh %394 : vector<8x64xf32>
    %396 = arith.mulf %391, %395 : vector<8x64xf32>
    %397 = arith.truncf %396 : vector<8x64xf32> to vector<8x64xbf16>
    %cst_58 = arith.constant dense<0.000000e+00> : vector<8x256xf32>
    %398 = tpu.matmul %397, %23, %cst_58 {dimension_numbers = #tpu.dot_dimension_numbers<[1], [0], [0], [1], [0, 0, 1, 1], [], []>} : vector<8x64xbf16>, vector<64x256xbf16>, vector<8x256xf32> -> vector<8x256xf32>
    %399 = arith.addf %336, %398 : vector<8x256xf32>
    %400 = vector.extract_strided_slice %399 {offsets = [0, 0], sizes = [8, 64], strides = [1, 1]} : vector<8x256xf32> to vector<8x64xf32>
    %401 = arith.negf %400 : vector<8x64xf32>
    %402 = math.exp %401 : vector<8x64xf32>
    %cst_59 = arith.constant 1.000000e+00 : f32
    %403 = vector.broadcast %cst_59 : f32 to vector<8x64xf32>
    %404 = arith.addf %403, %402 : vector<8x64xf32>
    %405 = arith.divf %403, %404 : vector<8x64xf32>
    %406 = vector.extract_strided_slice %399 {offsets = [0, 64], sizes = [8, 64], strides = [1, 1]} : vector<8x256xf32> to vector<8x64xf32>
    %407 = arith.negf %406 : vector<8x64xf32>
    %408 = math.exp %407 : vector<8x64xf32>
    %cst_60 = arith.constant 1.000000e+00 : f32
    %409 = vector.broadcast %cst_60 : f32 to vector<8x64xf32>
    %410 = arith.addf %409, %408 : vector<8x64xf32>
    %411 = arith.divf %409, %410 : vector<8x64xf32>
    %412 = vector.extract_strided_slice %399 {offsets = [0, 128], sizes = [8, 64], strides = [1, 1]} : vector<8x256xf32> to vector<8x64xf32>
    %413 = math.tanh %412 : vector<8x64xf32>
    %414 = vector.extract_strided_slice %399 {offsets = [0, 192], sizes = [8, 64], strides = [1, 1]} : vector<8x256xf32> to vector<8x64xf32>
    %415 = arith.negf %414 : vector<8x64xf32>
    %416 = math.exp %415 : vector<8x64xf32>
    %cst_61 = arith.constant 1.000000e+00 : f32
    %417 = vector.broadcast %cst_61 : f32 to vector<8x64xf32>
    %418 = arith.addf %417, %416 : vector<8x64xf32>
    %419 = arith.divf %417, %418 : vector<8x64xf32>
    %420 = arith.mulf %411, %394 : vector<8x64xf32>
    %421 = arith.mulf %405, %413 : vector<8x64xf32>
    %422 = arith.addf %420, %421 : vector<8x64xf32>
    %423 = math.tanh %422 : vector<8x64xf32>
    %424 = arith.mulf %419, %423 : vector<8x64xf32>
    %425 = arith.truncf %424 : vector<8x64xf32> to vector<8x64xbf16>
    %cst_62 = arith.constant dense<0.000000e+00> : vector<8x256xf32>
    %426 = tpu.matmul %425, %23, %cst_62 {dimension_numbers = #tpu.dot_dimension_numbers<[1], [0], [0], [1], [0, 0, 1, 1], [], []>} : vector<8x64xbf16>, vector<64x256xbf16>, vector<8x256xf32> -> vector<8x256xf32>
    %427 = arith.addf %341, %426 : vector<8x256xf32>
    %428 = vector.extract_strided_slice %427 {offsets = [0, 0], sizes = [8, 64], strides = [1, 1]} : vector<8x256xf32> to vector<8x64xf32>
    %429 = arith.negf %428 : vector<8x64xf32>
    %430 = math.exp %429 : vector<8x64xf32>
    %cst_63 = arith.constant 1.000000e+00 : f32
    %431 = vector.broadcast %cst_63 : f32 to vector<8x64xf32>
    %432 = arith.addf %431, %430 : vector<8x64xf32>
    %433 = arith.divf %431, %432 : vector<8x64xf32>
    %434 = vector.extract_strided_slice %427 {offsets = [0, 64], sizes = [8, 64], strides = [1, 1]} : vector<8x256xf32> to vector<8x64xf32>
    %435 = arith.negf %434 : vector<8x64xf32>
    %436 = math.exp %435 : vector<8x64xf32>
    %cst_64 = arith.constant 1.000000e+00 : f32
    %437 = vector.broadcast %cst_64 : f32 to vector<8x64xf32>
    %438 = arith.addf %437, %436 : vector<8x64xf32>
    %439 = arith.divf %437, %438 : vector<8x64xf32>
    %440 = vector.extract_strided_slice %427 {offsets = [0, 128], sizes = [8, 64], strides = [1, 1]} : vector<8x256xf32> to vector<8x64xf32>
    %441 = math.tanh %440 : vector<8x64xf32>
    %442 = vector.extract_strided_slice %427 {offsets = [0, 192], sizes = [8, 64], strides = [1, 1]} : vector<8x256xf32> to vector<8x64xf32>
    %443 = arith.negf %442 : vector<8x64xf32>
    %444 = math.exp %443 : vector<8x64xf32>
    %cst_65 = arith.constant 1.000000e+00 : f32
    %445 = vector.broadcast %cst_65 : f32 to vector<8x64xf32>
    %446 = arith.addf %445, %444 : vector<8x64xf32>
    %447 = arith.divf %445, %446 : vector<8x64xf32>
    %448 = arith.mulf %439, %422 : vector<8x64xf32>
    %449 = arith.mulf %433, %441 : vector<8x64xf32>
    %450 = arith.addf %448, %449 : vector<8x64xf32>
    %451 = math.tanh %450 : vector<8x64xf32>
    %452 = arith.mulf %447, %451 : vector<8x64xf32>
    %453 = arith.truncf %452 : vector<8x64xf32> to vector<8x64xbf16>
    %cst_66 = arith.constant dense<0.000000e+00> : vector<8x256xf32>
    %454 = tpu.matmul %453, %23, %cst_66 {dimension_numbers = #tpu.dot_dimension_numbers<[1], [0], [0], [1], [0, 0, 1, 1], [], []>} : vector<8x64xbf16>, vector<64x256xbf16>, vector<8x256xf32> -> vector<8x256xf32>
    %455 = arith.addf %346, %454 : vector<8x256xf32>
    %456 = vector.extract_strided_slice %455 {offsets = [0, 0], sizes = [8, 64], strides = [1, 1]} : vector<8x256xf32> to vector<8x64xf32>
    %457 = arith.negf %456 : vector<8x64xf32>
    %458 = math.exp %457 : vector<8x64xf32>
    %cst_67 = arith.constant 1.000000e+00 : f32
    %459 = vector.broadcast %cst_67 : f32 to vector<8x64xf32>
    %460 = arith.addf %459, %458 : vector<8x64xf32>
    %461 = arith.divf %459, %460 : vector<8x64xf32>
    %462 = vector.extract_strided_slice %455 {offsets = [0, 64], sizes = [8, 64], strides = [1, 1]} : vector<8x256xf32> to vector<8x64xf32>
    %463 = arith.negf %462 : vector<8x64xf32>
    %464 = math.exp %463 : vector<8x64xf32>
    %cst_68 = arith.constant 1.000000e+00 : f32
    %465 = vector.broadcast %cst_68 : f32 to vector<8x64xf32>
    %466 = arith.addf %465, %464 : vector<8x64xf32>
    %467 = arith.divf %465, %466 : vector<8x64xf32>
    %468 = vector.extract_strided_slice %455 {offsets = [0, 128], sizes = [8, 64], strides = [1, 1]} : vector<8x256xf32> to vector<8x64xf32>
    %469 = math.tanh %468 : vector<8x64xf32>
    %470 = vector.extract_strided_slice %455 {offsets = [0, 192], sizes = [8, 64], strides = [1, 1]} : vector<8x256xf32> to vector<8x64xf32>
    %471 = arith.negf %470 : vector<8x64xf32>
    %472 = math.exp %471 : vector<8x64xf32>
    %cst_69 = arith.constant 1.000000e+00 : f32
    %473 = vector.broadcast %cst_69 : f32 to vector<8x64xf32>
    %474 = arith.addf %473, %472 : vector<8x64xf32>
    %475 = arith.divf %473, %474 : vector<8x64xf32>
    %476 = arith.mulf %467, %450 : vector<8x64xf32>
    %477 = arith.mulf %461, %469 : vector<8x64xf32>
    %478 = arith.addf %476, %477 : vector<8x64xf32>
    %479 = math.tanh %478 : vector<8x64xf32>
    %480 = arith.mulf %475, %479 : vector<8x64xf32>
    %481 = arith.truncf %480 : vector<8x64xf32> to vector<8x64xbf16>
    %cst_70 = arith.constant dense<0.000000e+00> : vector<8x256xf32>
    %482 = tpu.matmul %481, %23, %cst_70 {dimension_numbers = #tpu.dot_dimension_numbers<[1], [0], [0], [1], [0, 0, 1, 1], [], []>} : vector<8x64xbf16>, vector<64x256xbf16>, vector<8x256xf32> -> vector<8x256xf32>
    %483 = arith.addf %351, %482 : vector<8x256xf32>
    %484 = vector.extract_strided_slice %483 {offsets = [0, 0], sizes = [8, 64], strides = [1, 1]} : vector<8x256xf32> to vector<8x64xf32>
    %485 = arith.negf %484 : vector<8x64xf32>
    %486 = math.exp %485 : vector<8x64xf32>
    %cst_71 = arith.constant 1.000000e+00 : f32
    %487 = vector.broadcast %cst_71 : f32 to vector<8x64xf32>
    %488 = arith.addf %487, %486 : vector<8x64xf32>
    %489 = arith.divf %487, %488 : vector<8x64xf32>
    %490 = vector.extract_strided_slice %483 {offsets = [0, 64], sizes = [8, 64], strides = [1, 1]} : vector<8x256xf32> to vector<8x64xf32>
    %491 = arith.negf %490 : vector<8x64xf32>
    %492 = math.exp %491 : vector<8x64xf32>
    %cst_72 = arith.constant 1.000000e+00 : f32
    %493 = vector.broadcast %cst_72 : f32 to vector<8x64xf32>
    %494 = arith.addf %493, %492 : vector<8x64xf32>
    %495 = arith.divf %493, %494 : vector<8x64xf32>
    %496 = vector.extract_strided_slice %483 {offsets = [0, 128], sizes = [8, 64], strides = [1, 1]} : vector<8x256xf32> to vector<8x64xf32>
    %497 = math.tanh %496 : vector<8x64xf32>
    %498 = vector.extract_strided_slice %483 {offsets = [0, 192], sizes = [8, 64], strides = [1, 1]} : vector<8x256xf32> to vector<8x64xf32>
    %499 = arith.negf %498 : vector<8x64xf32>
    %500 = math.exp %499 : vector<8x64xf32>
    %cst_73 = arith.constant 1.000000e+00 : f32
    %501 = vector.broadcast %cst_73 : f32 to vector<8x64xf32>
    %502 = arith.addf %501, %500 : vector<8x64xf32>
    %503 = arith.divf %501, %502 : vector<8x64xf32>
    %504 = arith.mulf %495, %478 : vector<8x64xf32>
    %505 = arith.mulf %489, %497 : vector<8x64xf32>
    %506 = arith.addf %504, %505 : vector<8x64xf32>
    %507 = math.tanh %506 : vector<8x64xf32>
    %508 = arith.mulf %503, %507 : vector<8x64xf32>
    %509 = arith.truncf %508 : vector<8x64xf32> to vector<8x64xbf16>
    %cst_74 = arith.constant dense<0.000000e+00> : vector<8x256xf32>
    %510 = tpu.matmul %509, %23, %cst_74 {dimension_numbers = #tpu.dot_dimension_numbers<[1], [0], [0], [1], [0, 0, 1, 1], [], []>} : vector<8x64xbf16>, vector<64x256xbf16>, vector<8x256xf32> -> vector<8x256xf32>
    %511 = arith.addf %356, %510 : vector<8x256xf32>
    %512 = vector.extract_strided_slice %511 {offsets = [0, 0], sizes = [8, 64], strides = [1, 1]} : vector<8x256xf32> to vector<8x64xf32>
    %513 = arith.negf %512 : vector<8x64xf32>
    %514 = math.exp %513 : vector<8x64xf32>
    %cst_75 = arith.constant 1.000000e+00 : f32
    %515 = vector.broadcast %cst_75 : f32 to vector<8x64xf32>
    %516 = arith.addf %515, %514 : vector<8x64xf32>
    %517 = arith.divf %515, %516 : vector<8x64xf32>
    %518 = vector.extract_strided_slice %511 {offsets = [0, 64], sizes = [8, 64], strides = [1, 1]} : vector<8x256xf32> to vector<8x64xf32>
    %519 = arith.negf %518 : vector<8x64xf32>
    %520 = math.exp %519 : vector<8x64xf32>
    %cst_76 = arith.constant 1.000000e+00 : f32
    %521 = vector.broadcast %cst_76 : f32 to vector<8x64xf32>
    %522 = arith.addf %521, %520 : vector<8x64xf32>
    %523 = arith.divf %521, %522 : vector<8x64xf32>
    %524 = vector.extract_strided_slice %511 {offsets = [0, 128], sizes = [8, 64], strides = [1, 1]} : vector<8x256xf32> to vector<8x64xf32>
    %525 = math.tanh %524 : vector<8x64xf32>
    %526 = vector.extract_strided_slice %511 {offsets = [0, 192], sizes = [8, 64], strides = [1, 1]} : vector<8x256xf32> to vector<8x64xf32>
    %527 = arith.negf %526 : vector<8x64xf32>
    %528 = math.exp %527 : vector<8x64xf32>
    %cst_77 = arith.constant 1.000000e+00 : f32
    %529 = vector.broadcast %cst_77 : f32 to vector<8x64xf32>
    %530 = arith.addf %529, %528 : vector<8x64xf32>
    %531 = arith.divf %529, %530 : vector<8x64xf32>
    %532 = arith.mulf %523, %506 : vector<8x64xf32>
    %533 = arith.mulf %517, %525 : vector<8x64xf32>
    %534 = arith.addf %532, %533 : vector<8x64xf32>
    %535 = math.tanh %534 : vector<8x64xf32>
    %536 = arith.mulf %531, %535 : vector<8x64xf32>
    %537 = arith.truncf %536 : vector<8x64xf32> to vector<8x64xbf16>
    %cst_78 = arith.constant dense<0.000000e+00> : vector<8x256xf32>
    %538 = tpu.matmul %537, %23, %cst_78 {dimension_numbers = #tpu.dot_dimension_numbers<[1], [0], [0], [1], [0, 0, 1, 1], [], []>} : vector<8x64xbf16>, vector<64x256xbf16>, vector<8x256xf32> -> vector<8x256xf32>
    %539 = arith.addf %361, %538 : vector<8x256xf32>
    %540 = vector.extract_strided_slice %539 {offsets = [0, 0], sizes = [8, 64], strides = [1, 1]} : vector<8x256xf32> to vector<8x64xf32>
    %541 = arith.negf %540 : vector<8x64xf32>
    %542 = math.exp %541 : vector<8x64xf32>
    %cst_79 = arith.constant 1.000000e+00 : f32
    %543 = vector.broadcast %cst_79 : f32 to vector<8x64xf32>
    %544 = arith.addf %543, %542 : vector<8x64xf32>
    %545 = arith.divf %543, %544 : vector<8x64xf32>
    %546 = vector.extract_strided_slice %539 {offsets = [0, 64], sizes = [8, 64], strides = [1, 1]} : vector<8x256xf32> to vector<8x64xf32>
    %547 = arith.negf %546 : vector<8x64xf32>
    %548 = math.exp %547 : vector<8x64xf32>
    %cst_80 = arith.constant 1.000000e+00 : f32
    %549 = vector.broadcast %cst_80 : f32 to vector<8x64xf32>
    %550 = arith.addf %549, %548 : vector<8x64xf32>
    %551 = arith.divf %549, %550 : vector<8x64xf32>
    %552 = vector.extract_strided_slice %539 {offsets = [0, 128], sizes = [8, 64], strides = [1, 1]} : vector<8x256xf32> to vector<8x64xf32>
    %553 = math.tanh %552 : vector<8x64xf32>
    %554 = vector.extract_strided_slice %539 {offsets = [0, 192], sizes = [8, 64], strides = [1, 1]} : vector<8x256xf32> to vector<8x64xf32>
    %555 = arith.negf %554 : vector<8x64xf32>
    %556 = math.exp %555 : vector<8x64xf32>
    %cst_81 = arith.constant 1.000000e+00 : f32
    %557 = vector.broadcast %cst_81 : f32 to vector<8x64xf32>
    %558 = arith.addf %557, %556 : vector<8x64xf32>
    %559 = arith.divf %557, %558 : vector<8x64xf32>
    %560 = arith.mulf %551, %534 : vector<8x64xf32>
    %561 = arith.mulf %545, %553 : vector<8x64xf32>
    %562 = arith.addf %560, %561 : vector<8x64xf32>
    %563 = math.tanh %562 : vector<8x64xf32>
    %564 = arith.mulf %559, %563 : vector<8x64xf32>
    %565 = arith.truncf %564 : vector<8x64xf32> to vector<8x64xbf16>
    %cst_82 = arith.constant dense<0.000000e+00> : vector<8x256xf32>
    %566 = tpu.matmul %565, %23, %cst_82 {dimension_numbers = #tpu.dot_dimension_numbers<[1], [0], [0], [1], [0, 0, 1, 1], [], []>} : vector<8x64xbf16>, vector<64x256xbf16>, vector<8x256xf32> -> vector<8x256xf32>
    %567 = arith.addf %366, %566 : vector<8x256xf32>
    %568 = vector.extract_strided_slice %567 {offsets = [0, 0], sizes = [8, 64], strides = [1, 1]} : vector<8x256xf32> to vector<8x64xf32>
    %569 = arith.negf %568 : vector<8x64xf32>
    %570 = math.exp %569 : vector<8x64xf32>
    %cst_83 = arith.constant 1.000000e+00 : f32
    %571 = vector.broadcast %cst_83 : f32 to vector<8x64xf32>
    %572 = arith.addf %571, %570 : vector<8x64xf32>
    %573 = arith.divf %571, %572 : vector<8x64xf32>
    %574 = vector.extract_strided_slice %567 {offsets = [0, 64], sizes = [8, 64], strides = [1, 1]} : vector<8x256xf32> to vector<8x64xf32>
    %575 = arith.negf %574 : vector<8x64xf32>
    %576 = math.exp %575 : vector<8x64xf32>
    %cst_84 = arith.constant 1.000000e+00 : f32
    %577 = vector.broadcast %cst_84 : f32 to vector<8x64xf32>
    %578 = arith.addf %577, %576 : vector<8x64xf32>
    %579 = arith.divf %577, %578 : vector<8x64xf32>
    %580 = vector.extract_strided_slice %567 {offsets = [0, 128], sizes = [8, 64], strides = [1, 1]} : vector<8x256xf32> to vector<8x64xf32>
    %581 = math.tanh %580 : vector<8x64xf32>
    %582 = vector.extract_strided_slice %567 {offsets = [0, 192], sizes = [8, 64], strides = [1, 1]} : vector<8x256xf32> to vector<8x64xf32>
    %583 = arith.negf %582 : vector<8x64xf32>
    %584 = math.exp %583 : vector<8x64xf32>
    %cst_85 = arith.constant 1.000000e+00 : f32
    %585 = vector.broadcast %cst_85 : f32 to vector<8x64xf32>
    %586 = arith.addf %585, %584 : vector<8x64xf32>
    %587 = arith.divf %585, %586 : vector<8x64xf32>
    %588 = arith.mulf %579, %562 : vector<8x64xf32>
    %589 = arith.mulf %573, %581 : vector<8x64xf32>
    %590 = arith.addf %588, %589 : vector<8x64xf32>
    %591 = math.tanh %590 : vector<8x64xf32>
    %592 = arith.mulf %587, %591 : vector<8x64xf32>
    %593 = arith.truncf %592 : vector<8x64xf32> to vector<8x64xbf16>
    %c0_86 = arith.constant 0 : index
    %c0_87 = arith.constant 0 : index
    %594 = vector.load %arg7[%c0_86, %c0_87] : memref<64x128xbf16, #tpu.memory_space<vmem>>, vector<64x128xbf16>
    %cst_88 = arith.constant dense<0.000000e+00> : vector<8x128xf32>
    %595 = tpu.matmul %593, %594, %cst_88 {dimension_numbers = #tpu.dot_dimension_numbers<[1], [0], [0], [1], [0, 0, 1, 1], [], []>} : vector<8x64xbf16>, vector<64x128xbf16>, vector<8x128xf32> -> vector<8x128xf32>
    %c0_89 = arith.constant 0 : index
    %c0_90 = arith.constant 0 : index
    %596 = vector.load %arg8[%c0_89, %c0_90] : memref<1x128xf32, #tpu.memory_space<vmem>>, vector<1x128xf32>
    %597 = vector.broadcast %596 : vector<1x128xf32> to vector<8x128xf32>
    %598 = arith.addf %595, %597 : vector<8x128xf32>
    %c0_91 = arith.constant 0 : index
    %c0_92 = arith.constant 0 : index
    %599 = vector.load %arg9[%c0_91, %c0_92] : memref<8x128xf32, #tpu.memory_space<vmem>>, vector<8x128xf32>
    tpu.vector_store %arg9[%c0_91, %c0_92], %598 {strides = array<i32>} : memref<8x128xf32, #tpu.memory_space<vmem>>, vector<8x128xf32>,
    return
  }
}

</mosaic_0001>

<llo_original>
// kernel: rnn_forward.1
$region0: #{rnn_forward.1}
  #allocation0 [shape = 'u32[]', space=smem, size = 0x4, offset = 0x4, fixed_abs, tag = 'smem constant byte address 0x4 - core index']
  #allocation1 [shape = 'u32[72,128]{1,0:T(1,128)}', space=vmem, size = 0x9000, scoped, tag = 'internal scratch']
  %s0 = inlined_call_operand.vmem [shape: bf16[64,32], index: 0, kind: input, shape index: {}]
  %s1 = inlined_call_operand.vmem [shape: bf16[32,256], index: 1, kind: input, shape index: {}]
  %s2 = inlined_call_operand.vmem [shape: bf16[64,256], index: 2, kind: input, shape index: {}]
  %s3 = inlined_call_operand.vmem [shape: f32[1,256], index: 3, kind: input, shape index: {}]
  %s4 = inlined_call_operand.vmem [shape: bf16[64,256], index: 4, kind: input, shape index: {}]
  %s5 = inlined_call_operand.hbm [shape: bf16[64,256], index: 5, kind: input, shape index: {}]
  %s6 = inlined_call_operand.vmem [shape: f32[1,256], index: 6, kind: input, shape index: {}]
  %s7 = inlined_call_operand.hbm [shape: bf16[64,128], index: 7, kind: input, shape index: {}]
  %s8 = inlined_call_operand.vmem [shape: f32[1,128], index: 8, kind: input, shape index: {}]
  %s9 = inlined_call_operand.vmem [shape: f32[8,128], index: 9, kind: output, shape index: {}]
  %s10 = sld [smem:[#allocation0]]
  $region54: #{rnn_forward.1} parent=0
    _
  %s12 = ssub.s32 1, %s10
  %s13 = scalar_select 0, %s12, %s10
  $region1: #{rnn_forward.1} parent=0
    #allocation2 [shape = 'u8[32768]{0}', space=vmem, size = 0x8000, scoped, tag = 'input window, operand 5, single buffered']
    #allocation3 [shape = 's32[1]{0}', space=sflag, size = 0x4, scoped, tag = 'scoped memory for rnn_forward.1']
    #allocation4 [shape = 'u8[16384]{0}', space=vmem, size = 0x4000, scoped, tag = 'input window, operand 7, single buffered']
    #allocation5 [shape = 's32[1]{0}', space=sflag, size = 0x4, scoped, tag = 'scoped memory for rnn_forward.1']
    %14 = vsyncpa [#allocation3], 0
    %15 = vsyncpa [#allocation5], 0
    // Predicated region
    $region2: #{rnn_forward.1} parent=1 // pred_check
      _
    $region3: #{rnn_forward.1} parent=1 // pred_check_branch
      %17 = sbr.rel (0) target = $region5
    $region4: #{rnn_forward.1} parent=1 // pred_region
      _
    $region5: #{rnn_forward.1} parent=1 // pred_fallthru
      _
    // Predicated region
    $region6: #{rnn_forward.1} parent=1 // pred_check
      _
    $region7: #{rnn_forward.1} parent=1 // pred_check_branch
      %19 = sbr.rel (0) target = $region9
    $region8: #{rnn_forward.1} parent=1 // pred_region
      _
    $region9: #{rnn_forward.1} parent=1 // pred_fallthru
      _
    // Predicated region
    $region10: #{rnn_forward.1} parent=1 // pred_check
      _
    $region11: #{rnn_forward.1} parent=1 // pred_check_branch
      %21 = sbr.rel (0) target = $region13
    $region12: #{rnn_forward.1} parent=1 // pred_region
      _
    $region13: #{rnn_forward.1} parent=1 // pred_fallthru
      _
    // Predicated region
    $region14: #{rnn_forward.1} parent=1 // pred_check
      _
    $region15: #{rnn_forward.1} parent=1 // pred_check_branch
      %23 = sbr.rel (0) target = $region17
    $region16: #{rnn_forward.1} parent=1 // pred_region
      _
    $region17: #{rnn_forward.1} parent=1 // pred_fallthru
      _
    // Predicated region
    $region18: #{rnn_forward.1} parent=1 // pred_check
      _
    $region19: #{rnn_forward.1} parent=1 // pred_check_branch
      %25 = sbr.rel (0) target = $region21
    $region20: #{rnn_forward.1} parent=1 // pred_region
      _
    $region21: #{rnn_forward.1} parent=1 // pred_fallthru
      _
    // Predicated region
    $region22: #{rnn_forward.1} parent=1 // pred_check
      _
    $region23: #{rnn_forward.1} parent=1 // pred_check_branch
      %27 = sbr.rel (0) target = $region25
    $region24: #{rnn_forward.1} parent=1 // pred_region
      %29 = vsyncadd [#allocation3], 0
      %s30 = sshll.u32 %s5, 4
      %s31 = int_to_ptr.hbm [resolvable:$true] %s30
      %s32 = sshll.u32 [#allocation2], 4
      %s33 = int_to_ptr.vmem [resolvable:$true] %s32
      %38 = dma.hbm_to_vmem [thread:$0]  %s31, 1024, %s33, [#allocation3], 128, 128, 8
    $region25: #{rnn_forward.1} parent=1 // pred_fallthru
      _
    // Predicated region
    $region26: #{rnn_forward.1} parent=1 // pred_check
      _
    $region27: #{rnn_forward.1} parent=1 // pred_check_branch
      %40 = sbr.rel (0) target = $region29
    $region28: #{rnn_forward.1} parent=1 // pred_region
      _
    $region29: #{rnn_forward.1} parent=1 // pred_fallthru
      _
    // Predicated region
    $region30: #{rnn_forward.1} parent=1 // pred_check
      _
    $region31: #{rnn_forward.1} parent=1 // pred_check_branch
      %42 = sbr.rel (0) target = $region33
    $region32: #{rnn_forward.1} parent=1 // pred_region
      %44 = vsyncadd [#allocation5], 0
      %s45 = sshll.u32 %s7, 4
      %s46 = int_to_ptr.hbm [resolvable:$true] %s45
      %s47 = sshll.u32 [#allocation4], 4
      %s48 = int_to_ptr.vmem [resolvable:$true] %s47
      %53 = dma.hbm_to_vmem [thread:$0]  %s46, 512, %s48, [#allocation5], 64, 64, 4
    $region33: #{rnn_forward.1} parent=1 // pred_fallthru
      _
    // Predicated region
    $region34: #{rnn_forward.1} parent=1 // pred_check
      _
    $region35: #{rnn_forward.1} parent=1 // pred_check_branch
      %55 = sbr.rel (0) target = $region37
    $region36: #{rnn_forward.1} parent=1 // pred_region
      _
    $region37: #{rnn_forward.1} parent=1 // pred_fallthru
      _
    // Predicated region
    $region38: #{rnn_forward.1} parent=1 // pred_check
      _
    $region39: #{rnn_forward.1} parent=1 // pred_check_branch
      %57 = sbr.rel (0) target = $region41
    $region40: #{rnn_forward.1} parent=1 // pred_region
      %59 = dma.done [#allocation3], 1024
    $region41: #{rnn_forward.1} parent=1 // pred_fallthru
      _
    // Predicated region
    $region42: #{rnn_forward.1} parent=1 // pred_check
      _
    $region43: #{rnn_forward.1} parent=1 // pred_check_branch
      %61 = sbr.rel (0) target = $region45
    $region44: #{rnn_forward.1} parent=1 // pred_region
      %63 = dma.done [#allocation5], 512
    $region45: #{rnn_forward.1} parent=1 // pred_fallthru
      _
    %v65 = vlaneseq
    %v66 = vand.u32 %v65, 127
    %v67 = vadd.s32 %v66, 128
    %vm68 = vcmp.lt.s32.totalorder %v66, 0
    %v69 = vsub.s32 0, %v66
    %v70 = vsel %vm68, %v69, %v66
    %v71 = vshrl.u32 %v70, 6
    %v72 = vand.u32 %v70, 63
    %v73 = vsub.s32 0, %v72
    %v74 = vsel %vm68, %v73, %v72
    %vm75 = vcmp.lt.s32.totalorder %v67, 0
    %v76 = vsub.s32 0, %v67
    %v77 = vsel %vm75, %v76, %v67
    %v78 = vshrl.u32 %v77, 6
    %v79 = vand.u32 %v77, 63
    %v80 = vsub.s32 0, %v79
    %v81 = vsel %vm75, %v80, %v79
    %vm82 = vcmp.ne.s32.totalorder %v74, 0
    %vm83 = vcmp.ne.s32.totalorder %v81, 0
    %vm84 = vcmp.lt.s32.totalorder %v74, 0
    %vm85 = vcmp.lt.s32.totalorder %v81, 0
    %vm86 = vmand %vm84, %vm82
    %vm87 = vmand %vm85, %vm83
    %v88 = vadd.s32 %v74, 64
    %v89 = vadd.s32 %v81, 64
    %v90 = vsel %vm86, %v88, %v74
    %v91 = vsel %vm87, %v89, %v81
    %vm92 = vcmp.lt.s32.totalorder %v90, 32
    %vm93 = vcmp.lt.s32.totalorder %v91, 32
    %vm94 = vcmp.lt.s32.totalorder %v66, 32
    %v95 = vld [vmem:[%s2] sm:$0xff]
    %v96 = vld [vmem:[%s2 + $0x8] sm:$0xff]
    %v97 = vld [vmem:[%s2 + $0x10] sm:$0xff]
    %v98 = vld [vmem:[%s2 + $0x18] sm:$0xff]
    %v99 = vld [vmem:[%s2 + $0x20] sm:$0xff]
    %v100 = vld [vmem:[%s2 + $0x28] sm:$0xff]
    %v101 = vld [vmem:[%s2 + $0x30] sm:$0xff]
    %v102 = vld [vmem:[%s2 + $0x38] sm:$0xff]
    %v103 = vld [vmem:[#allocation2] sm:$0xff]
    %v104 = vld [vmem:[#allocation2 + $0x8] sm:$0xff]
    %v105 = vld [vmem:[#allocation2 + $0x10] sm:$0xff]
    %v106 = vld [vmem:[#allocation2 + $0x18] sm:$0xff]
    %v107 = vld [vmem:[#allocation2 + $0x20] sm:$0xff]
    %v108 = vld [vmem:[#allocation2 + $0x28] sm:$0xff]
    %v109 = vld [vmem:[#allocation2 + $0x30] sm:$0xff]
    %v110 = vld [vmem:[#allocation2 + $0x38] sm:$0xff]
    %v111 = vld [vmem:[%s0] sm:$0xf]
    %v112 = vld [vmem:[%s0 + $0x4] sm:$0xf]
    %v113 = vld [vmem:[%s0 + $0x8] sm:$0xf]
    %v114 = vld [vmem:[%s0 + $0xc] sm:$0xf]
    %v115 = vld [vmem:[%s0 + $0x10] sm:$0xf]
    %v116 = vld [vmem:[%s0 + $0x14] sm:$0xf]
    %v117 = vld [vmem:[%s0 + $0x18] sm:$0xf]
    %v118 = vld [vmem:[%s0 + $0x1c] sm:$0xf]
    %v119 = vld [vmem:[%s1] sm:$0xff]
    %v120 = vld [vmem:[%s1 + $0x8] sm:$0xff]
    %v121 = vld [vmem:[%s1 + $0x10] sm:$0xff]
    %v122 = vld [vmem:[%s1 + $0x18] sm:$0xff]
    %v123 = vld [vmem:[%s3] sm:$0x3]
    %v125 = vperm.slane %v123, 0
    %v126 = vperm.slane %v123, 1
    %v137 = vunpack.c.l.b16 %v111
    %v138 = vunpack.c.l.b16 %v112
    %v139 = vunpack.c.l.b16 %v113
    %v140 = vunpack.c.l.b16 %v114
    %v141 = vunpack.c.l.b16 %v115
    %v142 = vunpack.c.l.b16 %v116
    %v143 = vunpack.c.l.b16 %v117
    %v144 = vunpack.c.l.b16 %v118
    %v145 = vpack.c.b16 %v138, %v137
    %v146 = vpack.c.b16 %v140, %v139
    %v147 = vpack.c.b16 %v142, %v141
    %v148 = vpack.c.b16 %v144, %v143
    %v153 = vunpack.c.l.b16 %v119
    %v154 = vunpack.c.h.b16 %v119
    %v155 = vunpack.c.l.b16 %v120
    %v156 = vunpack.c.h.b16 %v120
    %v157 = vunpack.c.l.b16 %v121
    %v158 = vunpack.c.h.b16 %v121
    %v159 = vunpack.c.l.b16 %v122
    %v160 = vunpack.c.h.b16 %v122
    %v161 = vpack.c.b16 %v155, %v153
    %v162 = vpack.c.b16 %v156, %v154
    %v163 = vpack.c.b16 %v159, %v157
    %v164 = vpack.c.b16 %v160, %v158
    %vm169 = vcmask 261120
    %v171 = vsel %vm169, %v145, 0
    %v174 = vsel %vm169, %v146, 0
    %v177 = vsel %vm169, %v147, 0
    %v180 = vsel %vm169, %v148, 0
    %182 = vmatpush.bf16.msra.mxu0 0
    %183 = vmatpush.bf16.msra.mxu0 0
    %184 = vmatpush.bf16.msra.mxu0 0
    %185 = vmatpush.bf16.msra.mxu0 0
    %186 = vmatpush.bf16.msra.mxu0 0
    %187 = vmatpush.bf16.msra.mxu0 0
    %188 = vmatpush.bf16.msra.mxu0 %v163
    %189 = vmatpush.bf16.msra.mxu0 %v161
    %190 = vmatmul.bf16.gmra.mxu0 %v171
    %v191 = vpop.f32.mrf.mxu0
    %v192 = vadd.f32 %v125, %v191
    %v193 = vpop.f32.mrf.mxu0
    %v194 = vadd.f32 %v125, %v193
    %195 = vmatmul.bf16.gmra.mxu0 %v174
    %v196 = vpop.f32.mrf.mxu0
    %v197 = vadd.f32 %v125, %v196
    %v198 = vpop.f32.mrf.mxu0
    %v199 = vadd.f32 %v125, %v198
    %200 = vmatmul.bf16.gmra.mxu0 %v177
    %v201 = vpop.f32.mrf.mxu0
    %v202 = vadd.f32 %v125, %v201
    %v203 = vpop.f32.mrf.mxu0
    %v204 = vadd.f32 %v125, %v203
    %205 = vmatmul.bf16.gmra.mxu0 %v180
    %v206 = vpop.f32.mrf.mxu0
    %v207 = vadd.f32 %v125, %v206
    %v208 = vpop.f32.mrf.mxu0
    %v209 = vadd.f32 %v125, %v208
    %210 = vdwg.mxu0
    %211 = vmatpush.bf16.msra.mxu0 0
    %212 = vmatpush.bf16.msra.mxu0 0
    %213 = vmatpush.bf16.msra.mxu0 0
    %214 = vmatpush.bf16.msra.mxu0 0
    %215 = vmatpush.bf16.msra.mxu0 0
    %216 = vmatpush.bf16.msra.mxu0 0
    %217 = vmatpush.bf16.msra.mxu0 %v164
    %218 = vmatpush.bf16.msra.mxu0 %v162
    %219 = vmatmul.bf16.gmra.mxu0 %v171
    %v220 = vpop.f32.mrf.mxu0
    %v221 = vadd.f32 %v126, %v220
    %v222 = vpop.f32.mrf.mxu0
    %v223 = vadd.f32 %v126, %v222
    %224 = vmatmul.bf16.gmra.mxu0 %v174
    %v225 = vpop.f32.mrf.mxu0
    %v226 = vadd.f32 %v126, %v225
    %v227 = vpop.f32.mrf.mxu0
    %v228 = vadd.f32 %v126, %v227
    %229 = vmatmul.bf16.gmra.mxu0 %v177
    %v230 = vpop.f32.mrf.mxu0
    %v231 = vadd.f32 %v126, %v230
    %v232 = vpop.f32.mrf.mxu0
    %v233 = vadd.f32 %v126, %v232
    %234 = vmatmul.bf16.gmra.mxu0 %v180
    %v235 = vpop.f32.mrf.mxu0
    %v236 = vadd.f32 %v126, %v235
    %v237 = vpop.f32.mrf.mxu0
    %v238 = vadd.f32 %v126, %v237
    %239 = vdwg.mxu0
    %v240 = vsel %vm92, 1, 0
    %v241 = vsel %vm93, 1, 0
    %vm242 = vcmp.eq.s32.totalorder %v240, 1
    %vm243 = vcmp.eq.s32.totalorder %v241, 1
    %v244 = vsel %vm242, %v192, %v209
    %v245 = vsel %vm243, %v221, %v238
    %v246 = vsel %vm242, %v194, %v207
    %v247 = vsel %vm243, %v223, %v236
    %v248 = vsel %vm242, %v197, %v204
    %v249 = vsel %vm243, %v226, %v233
    %v250 = vsel %vm242, %v199, %v202
    %v251 = vsel %vm243, %v228, %v231
    %v252 = vsel %vm242, %v202, %v199
    %v253 = vsel %vm243, %v231, %v228
    %v254 = vsel %vm242, %v204, %v197
    %v255 = vsel %vm243, %v233, %v226
    %v256 = vsel %vm242, %v207, %v194
    %v257 = vsel %vm243, %v236, %v223
    %v258 = vsel %vm242, %v209, %v192
    %v259 = vsel %vm243, %v238, %v221
    %v268 = vunpack.c.l.b16 %v95
    %v269 = vunpack.c.h.b16 %v95
    %v270 = vunpack.c.l.b16 %v96
    %v271 = vunpack.c.h.b16 %v96
    %v272 = vunpack.c.l.b16 %v97
    %v273 = vunpack.c.h.b16 %v97
    %v274 = vunpack.c.l.b16 %v98
    %v275 = vunpack.c.h.b16 %v98
    %v276 = vunpack.c.l.b16 %v99
    %v277 = vunpack.c.h.b16 %v99
    %v278 = vunpack.c.l.b16 %v100
    %v279 = vunpack.c.h.b16 %v100
    %v280 = vunpack.c.l.b16 %v101
    %v281 = vunpack.c.h.b16 %v101
    %v282 = vunpack.c.l.b16 %v102
    %v283 = vunpack.c.h.b16 %v102
    %v284 = vpack.c.b16 %v270, %v268
    %v285 = vpack.c.b16 %v271, %v269
    %v286 = vpack.c.b16 %v274, %v272
    %v287 = vpack.c.b16 %v275, %v273
    %v288 = vpack.c.b16 %v278, %v276
    %v289 = vpack.c.b16 %v279, %v277
    %v290 = vpack.c.b16 %v282, %v280
    %v291 = vpack.c.b16 %v283, %v281
    %vm300 = vcmask 523264
    %v302 = vsel %vm300, 0, 0
    %304 = vmatpush.bf16.msra.mxu0 0
    %305 = vmatpush.bf16.msra.mxu0 0
    %306 = vmatpush.bf16.msra.mxu0 0
    %307 = vmatpush.bf16.msra.mxu0 0
    %308 = vmatpush.bf16.msra.mxu0 %v290
    %309 = vmatpush.bf16.msra.mxu0 %v288
    %310 = vmatpush.bf16.msra.mxu0 %v286
    %311 = vmatpush.bf16.msra.mxu0 %v284
    %312 = vmatmul.bf16.gmra.mxu0 %v302
    %v313 = vpop.f32.mrf.mxu0
    %v314 = vadd.f32 0.0, %v313
    %v315 = vpop.f32.mrf.mxu0
    %316 = vdwg.mxu0
    %317 = vmatpush.bf16.msra.mxu0 0
    %318 = vmatpush.bf16.msra.mxu0 0
    %319 = vmatpush.bf16.msra.mxu0 0
    %320 = vmatpush.bf16.msra.mxu0 0
    %321 = vmatpush.bf16.msra.mxu0 %v291
    %322 = vmatpush.bf16.msra.mxu0 %v289
    %323 = vmatpush.bf16.msra.mxu0 %v287
    %324 = vmatpush.bf16.msra.mxu0 %v285
    %325 = vmatmul.bf16.gmra.mxu0 %v302
    %v326 = vpop.f32.mrf.mxu0
    %v327 = vadd.f32 0.0, %v326
    %v328 = vpop.f32.mrf.mxu0
    %329 = vdwg.mxu0
    %v330 = vadd.f32 %v244, %v314
    %v331 = vadd.f32 %v245, %v327
    %v332 = vxor.u32 %v330, 2147483648
    %v333 = vmul.f32 %v332, 1.442695
    %v334 = vpow.pop %v333
    %v335 = vadd.f32 %v334, 1.0
    %v336 = vrcp.pop %v335
    %v337 = vmul.f32 %v335, %v336
    %v338 = vsub.f32 1.0, %v337
    %v339 = vmul.f32 %v336, %v338
    %v340 = vadd.f32 %v336, %v339
    %vm341 = vweird.f32 %v335
    %vm342 = vweird.f32 %v336
    %vm343 = vmor %vm341, %vm342
    %v344 = vsel %vm343, %v336, %v340
    %v345 = vand.u32 2147483647, %v335
    %vm346 = vcmp.eq.f32.partialorder %v345, 8.507059e+37
    %v347 = vand.u32 %v335, 2147483648
    %v348 = vor.u32 1.1754944e-38, %v347
    %v349 = vsel %vm346, %v348, %v344
    %v350 = vmul.f32 1.0, %v349
    %v351 = vtanh.pop %v331
    %v352 = vxor.u32 %v331, 2147483648
    %v353 = vmul.f32 %v352, 1.442695
    %v354 = vpow.pop %v353
    %v355 = vadd.f32 %v354, 1.0
    %v356 = vrcp.pop %v355
    %v357 = vmul.f32 %v355, %v356
    %v358 = vsub.f32 1.0, %v357
    %v359 = vmul.f32 %v356, %v358
    %v360 = vadd.f32 %v356, %v359
    %vm361 = vweird.f32 %v355
    %vm362 = vweird.f32 %v356
    %vm363 = vmor %vm361, %vm362
    %v364 = vsel %vm363, %v356, %v360
    %v365 = vand.u32 2147483647, %v355
    %vm366 = vcmp.eq.f32.partialorder %v365, 8.507059e+37
    %v367 = vand.u32 %v355, 2147483648
    %v368 = vor.u32 1.1754944e-38, %v367
    %v369 = vsel %vm366, %v368, %v364
    %v370 = vmul.f32 1.0, %v369
    %v371 = vmul.f32 %v350, 0.0
    %v372 = vmul.f32 %v350, %v351
    %374 = vrot.lane.b32.xlu0 %v372, 64
    %v375 = vpop.permute.xlu0 %374
    %v377 = vadd.f32 %v371, %v375
    %v378 = vtanh.pop %v377
    %v379 = vmul.f32 %v370, %v378
    %v380 = vpack.c.bf16 %v379, %v379
    %382 = vrot.lane.b32.xlu0 %v380, 64
    %v383 = vpop.permute.xlu0 %382
    %v385 = vsel %vm300, %v383, 0
    %387 = vmatpush.bf16.msra.mxu0 0
    %388 = vmatpush.bf16.msra.mxu0 0
    %389 = vmatpush.bf16.msra.mxu0 0
    %390 = vmatpush.bf16.msra.mxu0 0
    %391 = vmatpush.bf16.msra.mxu0 %v290
    %392 = vmatpush.bf16.msra.mxu0 %v288
    %393 = vmatpush.bf16.msra.mxu0 %v286
    %394 = vmatpush.bf16.msra.mxu0 %v284
    %395 = vmatmul.bf16.gmra.mxu0 %v385
    %v396 = vpop.f32.mrf.mxu0
    %v397 = vadd.f32 0.0, %v396
    %v398 = vpop.f32.mrf.mxu0
    %399 = vdwg.mxu0
    %400 = vmatpush.bf16.msra.mxu0 0
    %401 = vmatpush.bf16.msra.mxu0 0
    %402 = vmatpush.bf16.msra.mxu0 0
    %403 = vmatpush.bf16.msra.mxu0 0
    %404 = vmatpush.bf16.msra.mxu0 %v291
    %405 = vmatpush.bf16.msra.mxu0 %v289
    %406 = vmatpush.bf16.msra.mxu0 %v287
    %407 = vmatpush.bf16.msra.mxu0 %v285
    %408 = vmatmul.bf16.gmra.mxu0 %v385
    %v409 = vpop.f32.mrf.mxu0
    %v410 = vadd.f32 0.0, %v409
    %v411 = vpop.f32.mrf.mxu0
    %412 = vdwg.mxu0
    %v413 = vadd.f32 %v246, %v397
    %v414 = vadd.f32 %v247, %v410
    %v415 = vxor.u32 %v413, 2147483648
    %v416 = vmul.f32 %v415, 1.442695
    %v417 = vpow.pop %v416
    %v418 = vadd.f32 %v417, 1.0
    %v419 = vrcp.pop %v418
    %v420 = vmul.f32 %v418, %v419
    %v421 = vsub.f32 1.0, %v420
    %v422 = vmul.f32 %v419, %v421
    %v423 = vadd.f32 %v419, %v422
    %vm424 = vweird.f32 %v418
    %vm425 = vweird.f32 %v419
    %vm426 = vmor %vm424, %vm425
    %v427 = vsel %vm426, %v419, %v423
    %v428 = vand.u32 2147483647, %v418
    %vm429 = vcmp.eq.f32.partialorder %v428, 8.507059e+37
    %v430 = vand.u32 %v418, 2147483648
    %v431 = vor.u32 1.1754944e-38, %v430
    %v432 = vsel %vm429, %v431, %v427
    %v433 = vmul.f32 1.0, %v432
    %v434 = vtanh.pop %v414
    %v435 = vxor.u32 %v414, 2147483648
    %v436 = vmul.f32 %v435, 1.442695
    %v437 = vpow.pop %v436
    %v438 = vadd.f32 %v437, 1.0
    %v439 = vrcp.pop %v438
    %v440 = vmul.f32 %v438, %v439
    %v441 = vsub.f32 1.0, %v440
    %v442 = vmul.f32 %v439, %v441
    %v443 = vadd.f32 %v439, %v442
    %vm444 = vweird.f32 %v438
    %vm445 = vweird.f32 %v439
    %vm446 = vmor %vm444, %vm445
    %v447 = vsel %vm446, %v439, %v443
    %v448 = vand.u32 2147483647, %v438
    %vm449 = vcmp.eq.f32.partialorder %v448, 8.507059e+37
    %v450 = vand.u32 %v438, 2147483648
    %v451 = vor.u32 1.1754944e-38, %v450
    %v452 = vsel %vm449, %v451, %v447
    %v453 = vmul.f32 1.0, %v452
    %v454 = vmul.f32 %v433, %v377
    %v455 = vmul.f32 %v433, %v434
    %457 = vrot.lane.b32.xlu0 %v455, 64
    %v458 = vpop.permute.xlu0 %457
    %v460 = vadd.f32 %v454, %v458
    %v461 = vtanh.pop %v460
    %v462 = vmul.f32 %v453, %v461
    %v463 = vpack.c.bf16 %v462, %v462
    %465 = vrot.lane.b32.xlu0 %v463, 64
    %v466 = vpop.permute.xlu0 %465
    %v468 = vsel %vm300, %v466, 0
    %470 = vmatpush.bf16.msra.mxu0 0
    %471 = vmatpush.bf16.msra.mxu0 0
    %472 = vmatpush.bf16.msra.mxu0 0
    %473 = vmatpush.bf16.msra.mxu0 0
    %474 = vmatpush.bf16.msra.mxu0 %v290
    %475 = vmatpush.bf16.msra.mxu0 %v288
    %476 = vmatpush.bf16.msra.mxu0 %v286
    %477 = vmatpush.bf16.msra.mxu0 %v284
    %478 = vmatmul.bf16.gmra.mxu0 %v468
    %v479 = vpop.f32.mrf.mxu0
    %v480 = vadd.f32 0.0, %v479
    %v481 = vpop.f32.mrf.mxu0
    %482 = vdwg.mxu0
    %483 = vmatpush.bf16.msra.mxu0 0
    %484 = vmatpush.bf16.msra.mxu0 0
    %485 = vmatpush.bf16.msra.mxu0 0
    %486 = vmatpush.bf16.msra.mxu0 0
    %487 = vmatpush.bf16.msra.mxu0 %v291
    %488 = vmatpush.bf16.msra.mxu0 %v289
    %489 = vmatpush.bf16.msra.mxu0 %v287
    %490 = vmatpush.bf16.msra.mxu0 %v285
    %491 = vmatmul.bf16.gmra.mxu0 %v468
    %v492 = vpop.f32.mrf.mxu0
    %v493 = vadd.f32 0.0, %v492
    %v494 = vpop.f32.mrf.mxu0
    %495 = vdwg.mxu0
    %v496 = vadd.f32 %v248, %v480
    %v497 = vadd.f32 %v249, %v493
    %v498 = vxor.u32 %v496, 2147483648
    %v499 = vmul.f32 %v498, 1.442695
    %v500 = vpow.pop %v499
    %v501 = vadd.f32 %v500, 1.0
    %v502 = vrcp.pop %v501
    %v503 = vmul.f32 %v501, %v502
    %v504 = vsub.f32 1.0, %v503
    %v505 = vmul.f32 %v502, %v504
    %v506 = vadd.f32 %v502, %v505
    %vm507 = vweird.f32 %v501
    %vm508 = vweird.f32 %v502
    %vm509 = vmor %vm507, %vm508
    %v510 = vsel %vm509, %v502, %v506
    %v511 = vand.u32 2147483647, %v501
    %vm512 = vcmp.eq.f32.partialorder %v511, 8.507059e+37
    %v513 = vand.u32 %v501, 2147483648
    %v514 = vor.u32 1.1754944e-38, %v513
    %v515 = vsel %vm512, %v514, %v510
    %v516 = vmul.f32 1.0, %v515
    %v517 = vtanh.pop %v497
    %v518 = vxor.u32 %v497, 2147483648
    %v519 = vmul.f32 %v518, 1.442695
    %v520 = vpow.pop %v519
    %v521 = vadd.f32 %v520, 1.0
    %v522 = vrcp.pop %v521
    %v523 = vmul.f32 %v521, %v522
    %v524 = vsub.f32 1.0, %v523
    %v525 = vmul.f32 %v522, %v524
    %v526 = vadd.f32 %v522, %v525
    %vm527 = vweird.f32 %v521
    %vm528 = vweird.f32 %v522
    %vm529 = vmor %vm527, %vm528
    %v530 = vsel %vm529, %v522, %v526
    %v531 = vand.u32 2147483647, %v521
    %vm532 = vcmp.eq.f32.partialorder %v531, 8.507059e+37
    %v533 = vand.u32 %v521, 2147483648
    %v534 = vor.u32 1.1754944e-38, %v533
    %v535 = vsel %vm532, %v534, %v530
    %v536 = vmul.f32 1.0, %v535
    %v537 = vmul.f32 %v516, %v460
    %v538 = vmul.f32 %v516, %v517
    %540 = vrot.lane.b32.xlu0 %v538, 64
    %v541 = vpop.permute.xlu0 %540
    %v543 = vadd.f32 %v537, %v541
    %v544 = vtanh.pop %v543
    %v545 = vmul.f32 %v536, %v544
    %v546 = vpack.c.bf16 %v545, %v545
    %548 = vrot.lane.b32.xlu0 %v546, 64
    %v549 = vpop.permute.xlu0 %548
    %v551 = vsel %vm300, %v549, 0
    %553 = vmatpush.bf16.msra.mxu0 0
    %554 = vmatpush.bf16.msra.mxu0 0
    %555 = vmatpush.bf16.msra.mxu0 0
    %556 = vmatpush.bf16.msra.mxu0 0
    %557 = vmatpush.bf16.msra.mxu0 %v290
    %558 = vmatpush.bf16.msra.mxu0 %v288
    %559 = vmatpush.bf16.msra.mxu0 %v286
    %560 = vmatpush.bf16.msra.mxu0 %v284
    %561 = vmatmul.bf16.gmra.mxu0 %v551
    %v562 = vpop.f32.mrf.mxu0
    %v563 = vadd.f32 0.0, %v562
    %v564 = vpop.f32.mrf.mxu0
    %565 = vdwg.mxu0
    %566 = vmatpush.bf16.msra.mxu0 0
    %567 = vmatpush.bf16.msra.mxu0 0
    %568 = vmatpush.bf16.msra.mxu0 0
    %569 = vmatpush.bf16.msra.mxu0 0
    %570 = vmatpush.bf16.msra.mxu0 %v291
    %571 = vmatpush.bf16.msra.mxu0 %v289
    %572 = vmatpush.bf16.msra.mxu0 %v287
    %573 = vmatpush.bf16.msra.mxu0 %v285
    %574 = vmatmul.bf16.gmra.mxu0 %v551
    %v575 = vpop.f32.mrf.mxu0
    %v576 = vadd.f32 0.0, %v575
    %v577 = vpop.f32.mrf.mxu0
    %578 = vdwg.mxu0
    %v579 = vadd.f32 %v250, %v563
    %v580 = vadd.f32 %v251, %v576
    %v581 = vxor.u32 %v579, 2147483648
    %v582 = vmul.f32 %v581, 1.442695
    %v583 = vpow.pop %v582
    %v584 = vadd.f32 %v583, 1.0
    %v585 = vrcp.pop %v584
    %v586 = vmul.f32 %v584, %v585
    %v587 = vsub.f32 1.0, %v586
    %v588 = vmul.f32 %v585, %v587
    %v589 = vadd.f32 %v585, %v588
    %vm590 = vweird.f32 %v584
    %vm591 = vweird.f32 %v585
    %vm592 = vmor %vm590, %vm591
    %v593 = vsel %vm592, %v585, %v589
    %v594 = vand.u32 2147483647, %v584
    %vm595 = vcmp.eq.f32.partialorder %v594, 8.507059e+37
    %v596 = vand.u32 %v584, 2147483648
    %v597 = vor.u32 1.1754944e-38, %v596
    %v598 = vsel %vm595, %v597, %v593
    %v599 = vmul.f32 1.0, %v598
    %v600 = vtanh.pop %v580
    %v601 = vxor.u32 %v580, 2147483648
    %v602 = vmul.f32 %v601, 1.442695
    %v603 = vpow.pop %v602
    %v604 = vadd.f32 %v603, 1.0
    %v605 = vrcp.pop %v604
    %v606 = vmul.f32 %v604, %v605
    %v607 = vsub.f32 1.0, %v606
    %v608 = vmul.f32 %v605, %v607
    %v609 = vadd.f32 %v605, %v608
    %vm610 = vweird.f32 %v604
    %vm611 = vweird.f32 %v605
    %vm612 = vmor %vm610, %vm611
    %v613 = vsel %vm612, %v605, %v609
    %v614 = vand.u32 2147483647, %v604
    %vm615 = vcmp.eq.f32.partialorder %v614, 8.507059e+37
    %v616 = vand.u32 %v604, 2147483648
    %v617 = vor.u32 1.1754944e-38, %v616
    %v618 = vsel %vm615, %v617, %v613
    %v619 = vmul.f32 1.0, %v618
    %v620 = vmul.f32 %v599, %v543
    %v621 = vmul.f32 %v599, %v600
    %623 = vrot.lane.b32.xlu0 %v621, 64
    %v624 = vpop.permute.xlu0 %623
    %v626 = vadd.f32 %v620, %v624
    %v627 = vtanh.pop %v626
    %v628 = vmul.f32 %v619, %v627
    %v629 = vpack.c.bf16 %v628, %v628
    %631 = vrot.lane.b32.xlu0 %v629, 64
    %v632 = vpop.permute.xlu0 %631
    %v634 = vsel %vm300, %v632, 0
    %636 = vmatpush.bf16.msra.mxu0 0
    %637 = vmatpush.bf16.msra.mxu0 0
    %638 = vmatpush.bf16.msra.mxu0 0
    %639 = vmatpush.bf16.msra.mxu0 0
    %640 = vmatpush.bf16.msra.mxu0 %v290
    %641 = vmatpush.bf16.msra.mxu0 %v288
    %642 = vmatpush.bf16.msra.mxu0 %v286
    %643 = vmatpush.bf16.msra.mxu0 %v284
    %644 = vmatmul.bf16.gmra.mxu0 %v634
    %v645 = vpop.f32.mrf.mxu0
    %v646 = vadd.f32 0.0, %v645
    %v647 = vpop.f32.mrf.mxu0
    %648 = vdwg.mxu0
    %649 = vmatpush.bf16.msra.mxu0 0
    %650 = vmatpush.bf16.msra.mxu0 0
    %651 = vmatpush.bf16.msra.mxu0 0
    %652 = vmatpush.bf16.msra.mxu0 0
    %653 = vmatpush.bf16.msra.mxu0 %v291
    %654 = vmatpush.bf16.msra.mxu0 %v289
    %655 = vmatpush.bf16.msra.mxu0 %v287
    %656 = vmatpush.bf16.msra.mxu0 %v285
    %657 = vmatmul.bf16.gmra.mxu0 %v634
    %v658 = vpop.f32.mrf.mxu0
    %v659 = vadd.f32 0.0, %v658
    %v660 = vpop.f32.mrf.mxu0
    %661 = vdwg.mxu0
    %v662 = vadd.f32 %v252, %v646
    %v663 = vadd.f32 %v253, %v659
    %v664 = vxor.u32 %v662, 2147483648
    %v665 = vmul.f32 %v664, 1.442695
    %v666 = vpow.pop %v665
    %v667 = vadd.f32 %v666, 1.0
    %v668 = vrcp.pop %v667
    %v669 = vmul.f32 %v667, %v668
    %v670 = vsub.f32 1.0, %v669
    %v671 = vmul.f32 %v668, %v670
    %v672 = vadd.f32 %v668, %v671
    %vm673 = vweird.f32 %v667
    %vm674 = vweird.f32 %v668
    %vm675 = vmor %vm673, %vm674
    %v676 = vsel %vm675, %v668, %v672
    %v677 = vand.u32 2147483647, %v667
    %vm678 = vcmp.eq.f32.partialorder %v677, 8.507059e+37
    %v679 = vand.u32 %v667, 2147483648
    %v680 = vor.u32 1.1754944e-38, %v679
    %v681 = vsel %vm678, %v680, %v676
    %v682 = vmul.f32 1.0, %v681
    %v683 = vtanh.pop %v663
    %v684 = vxor.u32 %v663, 2147483648
    %v685 = vmul.f32 %v684, 1.442695
    %v686 = vpow.pop %v685
    %v687 = vadd.f32 %v686, 1.0
    %v688 = vrcp.pop %v687
    %v689 = vmul.f32 %v687, %v688
    %v690 = vsub.f32 1.0, %v689
    %v691 = vmul.f32 %v688, %v690
    %v692 = vadd.f32 %v688, %v691
    %vm693 = vweird.f32 %v687
    %vm694 = vweird.f32 %v688
    %vm695 = vmor %vm693, %vm694
    %v696 = vsel %vm695, %v688, %v692
    %v697 = vand.u32 2147483647, %v687
    %vm698 = vcmp.eq.f32.partialorder %v697, 8.507059e+37
    %v699 = vand.u32 %v687, 2147483648
    %v700 = vor.u32 1.1754944e-38, %v699
    %v701 = vsel %vm698, %v700, %v696
    %v702 = vmul.f32 1.0, %v701
    %v703 = vmul.f32 %v682, %v626
    %v704 = vmul.f32 %v682, %v683
    %706 = vrot.lane.b32.xlu0 %v704, 64
    %v707 = vpop.permute.xlu0 %706
    %v709 = vadd.f32 %v703, %v707
    %v710 = vtanh.pop %v709
    %v711 = vmul.f32 %v702, %v710
    %v712 = vpack.c.bf16 %v711, %v711
    %714 = vrot.lane.b32.xlu0 %v712, 64
    %v715 = vpop.permute.xlu0 %714
    %v717 = vsel %vm300, %v715, 0
    %719 = vmatpush.bf16.msra.mxu0 0
    %720 = vmatpush.bf16.msra.mxu0 0
    %721 = vmatpush.bf16.msra.mxu0 0
    %722 = vmatpush.bf16.msra.mxu0 0
    %723 = vmatpush.bf16.msra.mxu0 %v290
    %724 = vmatpush.bf16.msra.mxu0 %v288
    %725 = vmatpush.bf16.msra.mxu0 %v286
    %726 = vmatpush.bf16.msra.mxu0 %v284
    %727 = vmatmul.bf16.gmra.mxu0 %v717
    %v728 = vpop.f32.mrf.mxu0
    %v729 = vadd.f32 0.0, %v728
    %v730 = vpop.f32.mrf.mxu0
    %731 = vdwg.mxu0
    %732 = vmatpush.bf16.msra.mxu0 0
    %733 = vmatpush.bf16.msra.mxu0 0
    %734 = vmatpush.bf16.msra.mxu0 0
    %735 = vmatpush.bf16.msra.mxu0 0
    %736 = vmatpush.bf16.msra.mxu0 %v291
    %737 = vmatpush.bf16.msra.mxu0 %v289
    %738 = vmatpush.bf16.msra.mxu0 %v287
    %739 = vmatpush.bf16.msra.mxu0 %v285
    %740 = vmatmul.bf16.gmra.mxu0 %v717
    %v741 = vpop.f32.mrf.mxu0
    %v742 = vadd.f32 0.0, %v741
    %v743 = vpop.f32.mrf.mxu0
    %744 = vdwg.mxu0
    %v745 = vadd.f32 %v254, %v729
    %v746 = vadd.f32 %v255, %v742
    %v747 = vxor.u32 %v745, 2147483648
    %v748 = vmul.f32 %v747, 1.442695
    %v749 = vpow.pop %v748
    %v750 = vadd.f32 %v749, 1.0
    %v751 = vrcp.pop %v750
    %v752 = vmul.f32 %v750, %v751
    %v753 = vsub.f32 1.0, %v752
    %v754 = vmul.f32 %v751, %v753
    %v755 = vadd.f32 %v751, %v754
    %vm756 = vweird.f32 %v750
    %vm757 = vweird.f32 %v751
    %vm758 = vmor %vm756, %vm757
    %v759 = vsel %vm758, %v751, %v755
    %v760 = vand.u32 2147483647, %v750
    %vm761 = vcmp.eq.f32.partialorder %v760, 8.507059e+37
    %v762 = vand.u32 %v750, 2147483648
    %v763 = vor.u32 1.1754944e-38, %v762
    %v764 = vsel %vm761, %v763, %v759
    %v765 = vmul.f32 1.0, %v764
    %v766 = vtanh.pop %v746
    %v767 = vxor.u32 %v746, 2147483648
    %v768 = vmul.f32 %v767, 1.442695
    %v769 = vpow.pop %v768
    %v770 = vadd.f32 %v769, 1.0
    %v771 = vrcp.pop %v770
    %v772 = vmul.f32 %v770, %v771
    %v773 = vsub.f32 1.0, %v772
    %v774 = vmul.f32 %v771, %v773
    %v775 = vadd.f32 %v771, %v774
    %vm776 = vweird.f32 %v770
    %vm777 = vweird.f32 %v771
    %vm778 = vmor %vm776, %vm777
    %v779 = vsel %vm778, %v771, %v775
    %v780 = vand.u32 2147483647, %v770
    %vm781 = vcmp.eq.f32.partialorder %v780, 8.507059e+37
    %v782 = vand.u32 %v770, 2147483648
    %v783 = vor.u32 1.1754944e-38, %v782
    %v784 = vsel %vm781, %v783, %v779
    %v785 = vmul.f32 1.0, %v784
    %v786 = vmul.f32 %v765, %v709
    %v787 = vmul.f32 %v765, %v766
    %789 = vrot.lane.b32.xlu0 %v787, 64
    %v790 = vpop.permute.xlu0 %789
    %v792 = vadd.f32 %v786, %v790
    %v793 = vtanh.pop %v792
    %v794 = vmul.f32 %v785, %v793
    %v795 = vpack.c.bf16 %v794, %v794
    %797 = vrot.lane.b32.xlu0 %v795, 64
    %v798 = vpop.permute.xlu0 %797
    %v800 = vsel %vm300, %v798, 0
    %802 = vmatpush.bf16.msra.mxu0 0
    %803 = vmatpush.bf16.msra.mxu0 0
    %804 = vmatpush.bf16.msra.mxu0 0
    %805 = vmatpush.bf16.msra.mxu0 0
    %806 = vmatpush.bf16.msra.mxu0 %v290
    %807 = vmatpush.bf16.msra.mxu0 %v288
    %808 = vmatpush.bf16.msra.mxu0 %v286
    %809 = vmatpush.bf16.msra.mxu0 %v284
    %810 = vmatmul.bf16.gmra.mxu0 %v800
    %v811 = vpop.f32.mrf.mxu0
    %v812 = vadd.f32 0.0, %v811
    %v813 = vpop.f32.mrf.mxu0
    %814 = vdwg.mxu0
    %815 = vmatpush.bf16.msra.mxu0 0
    %816 = vmatpush.bf16.msra.mxu0 0
    %817 = vmatpush.bf16.msra.mxu0 0
    %818 = vmatpush.bf16.msra.mxu0 0
    %819 = vmatpush.bf16.msra.mxu0 %v291
    %820 = vmatpush.bf16.msra.mxu0 %v289
    %821 = vmatpush.bf16.msra.mxu0 %v287
    %822 = vmatpush.bf16.msra.mxu0 %v285
    %823 = vmatmul.bf16.gmra.mxu0 %v800
    %v824 = vpop.f32.mrf.mxu0
    %v825 = vadd.f32 0.0, %v824
    %v826 = vpop.f32.mrf.mxu0
    %827 = vdwg.mxu0
    %v828 = vadd.f32 %v256, %v812
    %v829 = vadd.f32 %v257, %v825
    %v830 = vxor.u32 %v828, 2147483648
    %v831 = vmul.f32 %v830, 1.442695
    %v832 = vpow.pop %v831
    %v833 = vadd.f32 %v832, 1.0
    %v834 = vrcp.pop %v833
    %v835 = vmul.f32 %v833, %v834
    %v836 = vsub.f32 1.0, %v835
    %v837 = vmul.f32 %v834, %v836
    %v838 = vadd.f32 %v834, %v837
    %vm839 = vweird.f32 %v833
    %vm840 = vweird.f32 %v834
    %vm841 = vmor %vm839, %vm840
    %v842 = vsel %vm841, %v834, %v838
    %v843 = vand.u32 2147483647, %v833
    %vm844 = vcmp.eq.f32.partialorder %v843, 8.507059e+37
    %v845 = vand.u32 %v833, 2147483648
    %v846 = vor.u32 1.1754944e-38, %v845
    %v847 = vsel %vm844, %v846, %v842
    %v848 = vmul.f32 1.0, %v847
    %v849 = vtanh.pop %v829
    %v850 = vxor.u32 %v829, 2147483648
    %v851 = vmul.f32 %v850, 1.442695
    %v852 = vpow.pop %v851
    %v853 = vadd.f32 %v852, 1.0
    %v854 = vrcp.pop %v853
    %v855 = vmul.f32 %v853, %v854
    %v856 = vsub.f32 1.0, %v855
    %v857 = vmul.f32 %v854, %v856
    %v858 = vadd.f32 %v854, %v857
    %vm859 = vweird.f32 %v853
    %vm860 = vweird.f32 %v854
    %vm861 = vmor %vm859, %vm860
    %v862 = vsel %vm861, %v854, %v858
    %v863 = vand.u32 2147483647, %v853
    %vm864 = vcmp.eq.f32.partialorder %v863, 8.507059e+37
    %v865 = vand.u32 %v853, 2147483648
    %v866 = vor.u32 1.1754944e-38, %v865
    %v867 = vsel %vm864, %v866, %v862
    %v868 = vmul.f32 1.0, %v867
    %v869 = vmul.f32 %v848, %v792
    %v870 = vmul.f32 %v848, %v849
    %872 = vrot.lane.b32.xlu0 %v870, 64
    %v873 = vpop.permute.xlu0 %872
    %v875 = vadd.f32 %v869, %v873
    %v876 = vtanh.pop %v875
    %v877 = vmul.f32 %v868, %v876
    %v878 = vpack.c.bf16 %v877, %v877
    %880 = vrot.lane.b32.xlu0 %v878, 64
    %v881 = vpop.permute.xlu0 %880
    %v883 = vsel %vm300, %v881, 0
    %885 = vmatpush.bf16.msra.mxu0 0
    %886 = vmatpush.bf16.msra.mxu0 0
    %887 = vmatpush.bf16.msra.mxu0 0
    %888 = vmatpush.bf16.msra.mxu0 0
    %889 = vmatpush.bf16.msra.mxu0 %v290
    %890 = vmatpush.bf16.msra.mxu0 %v288
    %891 = vmatpush.bf16.msra.mxu0 %v286
    %892 = vmatpush.bf16.msra.mxu0 %v284
    %893 = vmatmul.bf16.gmra.mxu0 %v883
    %v894 = vpop.f32.mrf.mxu0
    %v895 = vadd.f32 0.0, %v894
    %v896 = vpop.f32.mrf.mxu0
    %897 = vdwg.mxu0
    %898 = vmatpush.bf16.msra.mxu0 0
    %899 = vmatpush.bf16.msra.mxu0 0
    %900 = vmatpush.bf16.msra.mxu0 0
    %901 = vmatpush.bf16.msra.mxu0 0
    %902 = vmatpush.bf16.msra.mxu0 %v291
    %903 = vmatpush.bf16.msra.mxu0 %v289
    %904 = vmatpush.bf16.msra.mxu0 %v287
    %905 = vmatpush.bf16.msra.mxu0 %v285
    %906 = vmatmul.bf16.gmra.mxu0 %v883
    %v907 = vpop.f32.mrf.mxu0
    %v908 = vadd.f32 0.0, %v907
    %v909 = vpop.f32.mrf.mxu0
    %910 = vdwg.mxu0
    %v911 = vadd.f32 %v258, %v895
    %v912 = vadd.f32 %v259, %v908
    %v913 = vxor.u32 %v911, 2147483648
    %v914 = vmul.f32 %v913, 1.442695
    %v915 = vpow.pop %v914
    %v916 = vadd.f32 %v915, 1.0
    %v917 = vrcp.pop %v916
    %v918 = vmul.f32 %v916, %v917
    %v919 = vsub.f32 1.0, %v918
    %v920 = vmul.f32 %v917, %v919
    %v921 = vadd.f32 %v917, %v920
    %vm922 = vweird.f32 %v916
    %vm923 = vweird.f32 %v917
    %vm924 = vmor %vm922, %vm923
    %v925 = vsel %vm924, %v917, %v921
    %v926 = vand.u32 2147483647, %v916
    %vm927 = vcmp.eq.f32.partialorder %v926, 8.507059e+37
    %v928 = vand.u32 %v916, 2147483648
    %v929 = vor.u32 1.1754944e-38, %v928
    %v930 = vsel %vm927, %v929, %v925
    %v931 = vmul.f32 1.0, %v930
    %v932 = vtanh.pop %v912
    %v933 = vxor.u32 %v912, 2147483648
    %v934 = vmul.f32 %v933, 1.442695
    %v935 = vpow.pop %v934
    %v936 = vadd.f32 %v935, 1.0
    %v937 = vrcp.pop %v936
    %v938 = vmul.f32 %v936, %v937
    %v939 = vsub.f32 1.0, %v938
    %v940 = vmul.f32 %v937, %v939
    %v941 = vadd.f32 %v937, %v940
    %vm942 = vweird.f32 %v936
    %vm943 = vweird.f32 %v937
    %vm944 = vmor %vm942, %vm943
    %v945 = vsel %vm944, %v937, %v941
    %v946 = vand.u32 2147483647, %v936
    %vm947 = vcmp.eq.f32.partialorder %v946, 8.507059e+37
    %v948 = vand.u32 %v936, 2147483648
    %v949 = vor.u32 1.1754944e-38, %v948
    %v950 = vsel %vm947, %v949, %v945
    %v951 = vmul.f32 1.0, %v950
    %v952 = vmul.f32 %v931, %v875
    %v953 = vmul.f32 %v931, %v932
    %955 = vrot.lane.b32.xlu0 %v953, 64
    %v956 = vpop.permute.xlu0 %955
    %v958 = vadd.f32 %v952, %v956
    %v959 = vtanh.pop %v958
    %v960 = vmul.f32 %v951, %v959
    %v961 = vsel %vm94, 1, 0
    %vm962 = vcmp.eq.s32.totalorder %v961, 1
    %964 = vrot.lane.b32.xlu0 %v379, 64
    %v965 = vpop.permute.xlu0 %964
    %968 = vrot.lane.b32.xlu0 %v960, 64
    %v969 = vpop.permute.xlu0 %968
    %v971 = vsel %vm962, %v965, %v969
    %973 = vrot.lane.b32.xlu0 %v462, 64
    %v974 = vpop.permute.xlu0 %973
    %977 = vrot.lane.b32.xlu0 %v877, 64
    %v978 = vpop.permute.xlu0 %977
    %v980 = vsel %vm962, %v974, %v978
    %982 = vrot.lane.b32.xlu0 %v545, 64
    %v983 = vpop.permute.xlu0 %982
    %986 = vrot.lane.b32.xlu0 %v794, 64
    %v987 = vpop.permute.xlu0 %986
    %v989 = vsel %vm962, %v983, %v987
    %991 = vrot.lane.b32.xlu0 %v628, 64
    %v992 = vpop.permute.xlu0 %991
    %995 = vrot.lane.b32.xlu0 %v711, 64
    %v996 = vpop.permute.xlu0 %995
    %v998 = vsel %vm962, %v992, %v996
    %v999 = vsel %vm962, %v996, %v992
    %v1000 = vsel %vm962, %v987, %v983
    %v1001 = vsel %vm962, %v978, %v974
    %v1002 = vsel %vm962, %v969, %v965
    %v1003 = vpack.c.bf16 %v980, %v971
    %v1004 = vpack.c.bf16 %v998, %v989
    %v1005 = vpack.c.bf16 %v1000, %v999
    %v1006 = vpack.c.bf16 %v1002, %v1001
    %v1007 = vld [vmem:[%s4] sm:$0xff]
    %v1008 = vld [vmem:[%s4 + $0x8] sm:$0xff]
    %v1009 = vld [vmem:[%s4 + $0x10] sm:$0xff]
    %v1010 = vld [vmem:[%s4 + $0x18] sm:$0xff]
    %v1011 = vld [vmem:[%s4 + $0x20] sm:$0xff]
    %v1012 = vld [vmem:[%s4 + $0x28] sm:$0xff]
    %v1013 = vld [vmem:[%s4 + $0x30] sm:$0xff]
    %v1014 = vld [vmem:[%s4 + $0x38] sm:$0xff]
    %v1015 = vld [vmem:[%s6] sm:$0x3]
    %v1017 = vperm.slane %v1015, 0
    %v1018 = vperm.slane %v1015, 1
    %v1029 = vunpack.c.l.b16 %v1007
    %v1030 = vunpack.c.h.b16 %v1007
    %v1031 = vunpack.c.l.b16 %v1008
    %v1032 = vunpack.c.h.b16 %v1008
    %v1033 = vunpack.c.l.b16 %v1009
    %v1034 = vunpack.c.h.b16 %v1009
    %v1035 = vunpack.c.l.b16 %v1010
    %v1036 = vunpack.c.h.b16 %v1010
    %v1037 = vunpack.c.l.b16 %v1011
    %v1038 = vunpack.c.h.b16 %v1011
    %v1039 = vunpack.c.l.b16 %v1012
    %v1040 = vunpack.c.h.b16 %v1012
    %v1041 = vunpack.c.l.b16 %v1013
    %v1042 = vunpack.c.h.b16 %v1013
    %v1043 = vunpack.c.l.b16 %v1014
    %v1044 = vunpack.c.h.b16 %v1014
    %v1045 = vpack.c.b16 %v1031, %v1029
    %v1046 = vpack.c.b16 %v1032, %v1030
    %v1047 = vpack.c.b16 %v1035, %v1033
    %v1048 = vpack.c.b16 %v1036, %v1034
    %v1049 = vpack.c.b16 %v1039, %v1037
    %v1050 = vpack.c.b16 %v1040, %v1038
    %v1051 = vpack.c.b16 %v1043, %v1041
    %v1052 = vpack.c.b16 %v1044, %v1042
    %v1062 = vsel %vm300, %v1003, 0
    %v1065 = vsel %vm300, %v1004, 0
    %v1068 = vsel %vm300, %v1005, 0
    %v1071 = vsel %vm300, %v1006, 0
    %1073 = vmatpush.bf16.msra.mxu0 0
    %1074 = vmatpush.bf16.msra.mxu0 0
    %1075 = vmatpush.bf16.msra.mxu0 0
    %1076 = vmatpush.bf16.msra.mxu0 0
    %1077 = vmatpush.bf16.msra.mxu0 %v1051
    %1078 = vmatpush.bf16.msra.mxu0 %v1049
    %1079 = vmatpush.bf16.msra.mxu0 %v1047
    %1080 = vmatpush.bf16.msra.mxu0 %v1045
    %1081 = vmatmul.bf16.gmra.mxu0 %v1062
    %v1082 = vpop.f32.mrf.mxu0
    %v1083 = vadd.f32 %v1017, %v1082
    %v1084 = vpop.f32.mrf.mxu0
    %v1085 = vadd.f32 %v1017, %v1084
    %1086 = vmatmul.bf16.gmra.mxu0 %v1065
    %v1087 = vpop.f32.mrf.mxu0
    %v1088 = vadd.f32 %v1017, %v1087
    %v1089 = vpop.f32.mrf.mxu0
    %v1090 = vadd.f32 %v1017, %v1089
    %1091 = vmatmul.bf16.gmra.mxu0 %v1068
    %v1092 = vpop.f32.mrf.mxu0
    %v1093 = vadd.f32 %v1017, %v1092
    %v1094 = vpop.f32.mrf.mxu0
    %v1095 = vadd.f32 %v1017, %v1094
    %1096 = vmatmul.bf16.gmra.mxu0 %v1071
    %v1097 = vpop.f32.mrf.mxu0
    %v1098 = vadd.f32 %v1017, %v1097
    %v1099 = vpop.f32.mrf.mxu0
    %v1100 = vadd.f32 %v1017, %v1099
    %1101 = vdwg.mxu0
    %1102 = vmatpush.bf16.msra.mxu0 0
    %1103 = vmatpush.bf16.msra.mxu0 0
    %1104 = vmatpush.bf16.msra.mxu0 0
    %1105 = vmatpush.bf16.msra.mxu0 0
    %1106 = vmatpush.bf16.msra.mxu0 %v1052
    %1107 = vmatpush.bf16.msra.mxu0 %v1050
    %1108 = vmatpush.bf16.msra.mxu0 %v1048
    %1109 = vmatpush.bf16.msra.mxu0 %v1046
    %1110 = vmatmul.bf16.gmra.mxu0 %v1062
    %v1111 = vpop.f32.mrf.mxu0
    %v1112 = vadd.f32 %v1018, %v1111
    %v1113 = vpop.f32.mrf.mxu0
    %v1114 = vadd.f32 %v1018, %v1113
    %1115 = vmatmul.bf16.gmra.mxu0 %v1065
    %v1116 = vpop.f32.mrf.mxu0
    %v1117 = vadd.f32 %v1018, %v1116
    %v1118 = vpop.f32.mrf.mxu0
    %v1119 = vadd.f32 %v1018, %v1118
    %1120 = vmatmul.bf16.gmra.mxu0 %v1068
    %v1121 = vpop.f32.mrf.mxu0
    %v1122 = vadd.f32 %v1018, %v1121
    %v1123 = vpop.f32.mrf.mxu0
    %v1124 = vadd.f32 %v1018, %v1123
    %1125 = vmatmul.bf16.gmra.mxu0 %v1071
    %v1126 = vpop.f32.mrf.mxu0
    %v1127 = vadd.f32 %v1018, %v1126
    %v1128 = vpop.f32.mrf.mxu0
    %v1129 = vadd.f32 %v1018, %v1128
    %1130 = vdwg.mxu0
    %v1131 = vsel %vm242, %v1083, %v1100
    %v1132 = vsel %vm243, %v1112, %v1129
    %v1133 = vsel %vm242, %v1085, %v1098
    %v1134 = vsel %vm243, %v1114, %v1127
    %v1135 = vsel %vm242, %v1088, %v1095
    %v1136 = vsel %vm243, %v1117, %v1124
    %v1137 = vsel %vm242, %v1090, %v1093
    %v1138 = vsel %vm243, %v1119, %v1122
    %v1139 = vsel %vm242, %v1093, %v1090
    %v1140 = vsel %vm243, %v1122, %v1119
    %v1141 = vsel %vm242, %v1095, %v1088
    %v1142 = vsel %vm243, %v1124, %v1117
    %v1143 = vsel %vm242, %v1098, %v1085
    %v1144 = vsel %vm243, %v1127, %v1114
    %v1145 = vsel %vm242, %v1100, %v1083
    %v1146 = vsel %vm243, %v1129, %v1112
    %v1155 = vunpack.c.l.b16 %v103
    %v1156 = vunpack.c.h.b16 %v103
    %v1157 = vunpack.c.l.b16 %v104
    %v1158 = vunpack.c.h.b16 %v104
    %v1159 = vunpack.c.l.b16 %v105
    %v1160 = vunpack.c.h.b16 %v105
    %v1161 = vunpack.c.l.b16 %v106
    %v1162 = vunpack.c.h.b16 %v106
    %v1163 = vunpack.c.l.b16 %v107
    %v1164 = vunpack.c.h.b16 %v107
    %v1165 = vunpack.c.l.b16 %v108
    %v1166 = vunpack.c.h.b16 %v108
    %v1167 = vunpack.c.l.b16 %v109
    %v1168 = vunpack.c.h.b16 %v109
    %v1169 = vunpack.c.l.b16 %v110
    %v1170 = vunpack.c.h.b16 %v110
    %v1171 = vpack.c.b16 %v1157, %v1155
    %v1172 = vpack.c.b16 %v1158, %v1156
    %v1173 = vpack.c.b16 %v1161, %v1159
    %v1174 = vpack.c.b16 %v1162, %v1160
    %v1175 = vpack.c.b16 %v1165, %v1163
    %v1176 = vpack.c.b16 %v1166, %v1164
    %v1177 = vpack.c.b16 %v1169, %v1167
    %v1178 = vpack.c.b16 %v1170, %v1168
    %1187 = vmatpush.bf16.msra.mxu0 0
    %1188 = vmatpush.bf16.msra.mxu0 0
    %1189 = vmatpush.bf16.msra.mxu0 0
    %1190 = vmatpush.bf16.msra.mxu0 0
    %1191 = vmatpush.bf16.msra.mxu0 %v1177
    %1192 = vmatpush.bf16.msra.mxu0 %v1175
    %1193 = vmatpush.bf16.msra.mxu0 %v1173
    %1194 = vmatpush.bf16.msra.mxu0 %v1171
    %1195 = vmatmul.bf16.gmra.mxu0 %v302
    %v1196 = vpop.f32.mrf.mxu0
    %v1197 = vadd.f32 0.0, %v1196
    %v1198 = vpop.f32.mrf.mxu0
    %1199 = vdwg.mxu0
    %1200 = vmatpush.bf16.msra.mxu0 0
    %1201 = vmatpush.bf16.msra.mxu0 0
    %1202 = vmatpush.bf16.msra.mxu0 0
    %1203 = vmatpush.bf16.msra.mxu0 0
    %1204 = vmatpush.bf16.msra.mxu0 %v1178
    %1205 = vmatpush.bf16.msra.mxu0 %v1176
    %1206 = vmatpush.bf16.msra.mxu0 %v1174
    %1207 = vmatpush.bf16.msra.mxu0 %v1172
    %1208 = vmatmul.bf16.gmra.mxu0 %v302
    %v1209 = vpop.f32.mrf.mxu0
    %v1210 = vadd.f32 0.0, %v1209
    %v1211 = vpop.f32.mrf.mxu0
    %1212 = vdwg.mxu0
    %v1213 = vadd.f32 %v1131, %v1197
    %v1214 = vadd.f32 %v1132, %v1210
    %v1215 = vxor.u32 %v1213, 2147483648
    %v1216 = vmul.f32 %v1215, 1.442695
    %v1217 = vpow.pop %v1216
    %v1218 = vadd.f32 %v1217, 1.0
    %v1219 = vrcp.pop %v1218
    %v1220 = vmul.f32 %v1218, %v1219
    %v1221 = vsub.f32 1.0, %v1220
    %v1222 = vmul.f32 %v1219, %v1221
    %v1223 = vadd.f32 %v1219, %v1222
    %vm1224 = vweird.f32 %v1218
    %vm1225 = vweird.f32 %v1219
    %vm1226 = vmor %vm1224, %vm1225
    %v1227 = vsel %vm1226, %v1219, %v1223
    %v1228 = vand.u32 2147483647, %v1218
    %vm1229 = vcmp.eq.f32.partialorder %v1228, 8.507059e+37
    %v1230 = vand.u32 %v1218, 2147483648
    %v1231 = vor.u32 1.1754944e-38, %v1230
    %v1232 = vsel %vm1229, %v1231, %v1227
    %v1233 = vmul.f32 1.0, %v1232
    %v1234 = vtanh.pop %v1214
    %v1235 = vxor.u32 %v1214, 2147483648
    %v1236 = vmul.f32 %v1235, 1.442695
    %v1237 = vpow.pop %v1236
    %v1238 = vadd.f32 %v1237, 1.0
    %v1239 = vrcp.pop %v1238
    %v1240 = vmul.f32 %v1238, %v1239
    %v1241 = vsub.f32 1.0, %v1240
    %v1242 = vmul.f32 %v1239, %v1241
    %v1243 = vadd.f32 %v1239, %v1242
    %vm1244 = vweird.f32 %v1238
    %vm1245 = vweird.f32 %v1239
    %vm1246 = vmor %vm1244, %vm1245
    %v1247 = vsel %vm1246, %v1239, %v1243
    %v1248 = vand.u32 2147483647, %v1238
    %vm1249 = vcmp.eq.f32.partialorder %v1248, 8.507059e+37
    %v1250 = vand.u32 %v1238, 2147483648
    %v1251 = vor.u32 1.1754944e-38, %v1250
    %v1252 = vsel %vm1249, %v1251, %v1247
    %v1253 = vmul.f32 1.0, %v1252
    %v1254 = vmul.f32 %v1233, 0.0
    %v1255 = vmul.f32 %v1233, %v1234
    %1257 = vrot.lane.b32.xlu0 %v1255, 64
    %v1258 = vpop.permute.xlu0 %1257
    %v1260 = vadd.f32 %v1254, %v1258
    %v1261 = vtanh.pop %v1260
    %v1262 = vmul.f32 %v1253, %v1261
    %v1263 = vpack.c.bf16 %v1262, %v1262
    %1265 = vrot.lane.b32.xlu0 %v1263, 64
    %v1266 = vpop.permute.xlu0 %1265
    %v1268 = vsel %vm300, %v1266, 0
    %1270 = vmatpush.bf16.msra.mxu0 0
    %1271 = vmatpush.bf16.msra.mxu0 0
    %1272 = vmatpush.bf16.msra.mxu0 0
    %1273 = vmatpush.bf16.msra.mxu0 0
    %1274 = vmatpush.bf16.msra.mxu0 %v1177
    %1275 = vmatpush.bf16.msra.mxu0 %v1175
    %1276 = vmatpush.bf16.msra.mxu0 %v1173
    %1277 = vmatpush.bf16.msra.mxu0 %v1171
    %1278 = vmatmul.bf16.gmra.mxu0 %v1268
    %v1279 = vpop.f32.mrf.mxu0
    %v1280 = vadd.f32 0.0, %v1279
    %v1281 = vpop.f32.mrf.mxu0
    %1282 = vdwg.mxu0
    %1283 = vmatpush.bf16.msra.mxu0 0
    %1284 = vmatpush.bf16.msra.mxu0 0
    %1285 = vmatpush.bf16.msra.mxu0 0
    %1286 = vmatpush.bf16.msra.mxu0 0
    %1287 = vmatpush.bf16.msra.mxu0 %v1178
    %1288 = vmatpush.bf16.msra.mxu0 %v1176
    %1289 = vmatpush.bf16.msra.mxu0 %v1174
    %1290 = vmatpush.bf16.msra.mxu0 %v1172
    %1291 = vmatmul.bf16.gmra.mxu0 %v1268
    %v1292 = vpop.f32.mrf.mxu0
    %v1293 = vadd.f32 0.0, %v1292
    %v1294 = vpop.f32.mrf.mxu0
    %1295 = vdwg.mxu0
    %v1296 = vadd.f32 %v1133, %v1280
    %v1297 = vadd.f32 %v1134, %v1293
    %v1298 = vxor.u32 %v1296, 2147483648
    %v1299 = vmul.f32 %v1298, 1.442695
    %v1300 = vpow.pop %v1299
    %v1301 = vadd.f32 %v1300, 1.0
    %v1302 = vrcp.pop %v1301
    %v1303 = vmul.f32 %v1301, %v1302
    %v1304 = vsub.f32 1.0, %v1303
    %v1305 = vmul.f32 %v1302, %v1304
    %v1306 = vadd.f32 %v1302, %v1305
    %vm1307 = vweird.f32 %v1301
    %vm1308 = vweird.f32 %v1302
    %vm1309 = vmor %vm1307, %vm1308
    %v1310 = vsel %vm1309, %v1302, %v1306
    %v1311 = vand.u32 2147483647, %v1301
    %vm1312 = vcmp.eq.f32.partialorder %v1311, 8.507059e+37
    %v1313 = vand.u32 %v1301, 2147483648
    %v1314 = vor.u32 1.1754944e-38, %v1313
    %v1315 = vsel %vm1312, %v1314, %v1310
    %v1316 = vmul.f32 1.0, %v1315
    %v1317 = vtanh.pop %v1297
    %v1318 = vxor.u32 %v1297, 2147483648
    %v1319 = vmul.f32 %v1318, 1.442695
    %v1320 = vpow.pop %v1319
    %v1321 = vadd.f32 %v1320, 1.0
    %v1322 = vrcp.pop %v1321
    %v1323 = vmul.f32 %v1321, %v1322
    %v1324 = vsub.f32 1.0, %v1323
    %v1325 = vmul.f32 %v1322, %v1324
    %v1326 = vadd.f32 %v1322, %v1325
    %vm1327 = vweird.f32 %v1321
    %vm1328 = vweird.f32 %v1322
    %vm1329 = vmor %vm1327, %vm1328
    %v1330 = vsel %vm1329, %v1322, %v1326
    %v1331 = vand.u32 2147483647, %v1321
    %vm1332 = vcmp.eq.f32.partialorder %v1331, 8.507059e+37
    %v1333 = vand.u32 %v1321, 2147483648
    %v1334 = vor.u32 1.1754944e-38, %v1333
    %v1335 = vsel %vm1332, %v1334, %v1330
    %v1336 = vmul.f32 1.0, %v1335
    %v1337 = vmul.f32 %v1316, %v1260
    %v1338 = vmul.f32 %v1316, %v1317
    %1340 = vrot.lane.b32.xlu0 %v1338, 64
    %v1341 = vpop.permute.xlu0 %1340
    %v1343 = vadd.f32 %v1337, %v1341
    %v1344 = vtanh.pop %v1343
    %v1345 = vmul.f32 %v1336, %v1344
    %v1346 = vpack.c.bf16 %v1345, %v1345
    %1348 = vrot.lane.b32.xlu0 %v1346, 64
    %v1349 = vpop.permute.xlu0 %1348
    %v1351 = vsel %vm300, %v1349, 0
    %1353 = vmatpush.bf16.msra.mxu0 0
    %1354 = vmatpush.bf16.msra.mxu0 0
    %1355 = vmatpush.bf16.msra.mxu0 0
    %1356 = vmatpush.bf16.msra.mxu0 0
    %1357 = vmatpush.bf16.msra.mxu0 %v1177
    %1358 = vmatpush.bf16.msra.mxu0 %v1175
    %1359 = vmatpush.bf16.msra.mxu0 %v1173
    %1360 = vmatpush.bf16.msra.mxu0 %v1171
    %1361 = vmatmul.bf16.gmra.mxu0 %v1351
    %v1362 = vpop.f32.mrf.mxu0
    %v1363 = vadd.f32 0.0, %v1362
    %v1364 = vpop.f32.mrf.mxu0
    %1365 = vdwg.mxu0
    %1366 = vmatpush.bf16.msra.mxu0 0
    %1367 = vmatpush.bf16.msra.mxu0 0
    %1368 = vmatpush.bf16.msra.mxu0 0
    %1369 = vmatpush.bf16.msra.mxu0 0
    %1370 = vmatpush.bf16.msra.mxu0 %v1178
    %1371 = vmatpush.bf16.msra.mxu0 %v1176
    %1372 = vmatpush.bf16.msra.mxu0 %v1174
    %1373 = vmatpush.bf16.msra.mxu0 %v1172
    %1374 = vmatmul.bf16.gmra.mxu0 %v1351
    %v1375 = vpop.f32.mrf.mxu0
    %v1376 = vadd.f32 0.0, %v1375
    %v1377 = vpop.f32.mrf.mxu0
    %1378 = vdwg.mxu0
    %v1379 = vadd.f32 %v1135, %v1363
    %v1380 = vadd.f32 %v1136, %v1376
    %v1381 = vxor.u32 %v1379, 2147483648
    %v1382 = vmul.f32 %v1381, 1.442695
    %v1383 = vpow.pop %v1382
    %v1384 = vadd.f32 %v1383, 1.0
    %v1385 = vrcp.pop %v1384
    %v1386 = vmul.f32 %v1384, %v1385
    %v1387 = vsub.f32 1.0, %v1386
    %v1388 = vmul.f32 %v1385, %v1387
    %v1389 = vadd.f32 %v1385, %v1388
    %vm1390 = vweird.f32 %v1384
    %vm1391 = vweird.f32 %v1385
    %vm1392 = vmor %vm1390, %vm1391
    %v1393 = vsel %vm1392, %v1385, %v1389
    %v1394 = vand.u32 2147483647, %v1384
    %vm1395 = vcmp.eq.f32.partialorder %v1394, 8.507059e+37
    %v1396 = vand.u32 %v1384, 2147483648
    %v1397 = vor.u32 1.1754944e-38, %v1396
    %v1398 = vsel %vm1395, %v1397, %v1393
    %v1399 = vmul.f32 1.0, %v1398
    %v1400 = vtanh.pop %v1380
    %v1401 = vxor.u32 %v1380, 2147483648
    %v1402 = vmul.f32 %v1401, 1.442695
    %v1403 = vpow.pop %v1402
    %v1404 = vadd.f32 %v1403, 1.0
    %v1405 = vrcp.pop %v1404
    %v1406 = vmul.f32 %v1404, %v1405
    %v1407 = vsub.f32 1.0, %v1406
    %v1408 = vmul.f32 %v1405, %v1407
    %v1409 = vadd.f32 %v1405, %v1408
    %vm1410 = vweird.f32 %v1404
    %vm1411 = vweird.f32 %v1405
    %vm1412 = vmor %vm1410, %vm1411
    %v1413 = vsel %vm1412, %v1405, %v1409
    %v1414 = vand.u32 2147483647, %v1404
    %vm1415 = vcmp.eq.f32.partialorder %v1414, 8.507059e+37
    %v1416 = vand.u32 %v1404, 2147483648
    %v1417 = vor.u32 1.1754944e-38, %v1416
    %v1418 = vsel %vm1415, %v1417, %v1413
    %v1419 = vmul.f32 1.0, %v1418
    %v1420 = vmul.f32 %v1399, %v1343
    %v1421 = vmul.f32 %v1399, %v1400
    %1423 = vrot.lane.b32.xlu0 %v1421, 64
    %v1424 = vpop.permute.xlu0 %1423
    %v1426 = vadd.f32 %v1420, %v1424
    %v1427 = vtanh.pop %v1426
    %v1428 = vmul.f32 %v1419, %v1427
    %v1429 = vpack.c.bf16 %v1428, %v1428
    %1431 = vrot.lane.b32.xlu0 %v1429, 64
    %v1432 = vpop.permute.xlu0 %1431
    %v1434 = vsel %vm300, %v1432, 0
    %1436 = vmatpush.bf16.msra.mxu0 0
    %1437 = vmatpush.bf16.msra.mxu0 0
    %1438 = vmatpush.bf16.msra.mxu0 0
    %1439 = vmatpush.bf16.msra.mxu0 0
    %1440 = vmatpush.bf16.msra.mxu0 %v1177
    %1441 = vmatpush.bf16.msra.mxu0 %v1175
    %1442 = vmatpush.bf16.msra.mxu0 %v1173
    %1443 = vmatpush.bf16.msra.mxu0 %v1171
    %1444 = vmatmul.bf16.gmra.mxu0 %v1434
    %v1445 = vpop.f32.mrf.mxu0
    %v1446 = vadd.f32 0.0, %v1445
    %v1447 = vpop.f32.mrf.mxu0
    %1448 = vdwg.mxu0
    %1449 = vmatpush.bf16.msra.mxu0 0
    %1450 = vmatpush.bf16.msra.mxu0 0
    %1451 = vmatpush.bf16.msra.mxu0 0
    %1452 = vmatpush.bf16.msra.mxu0 0
    %1453 = vmatpush.bf16.msra.mxu0 %v1178
    %1454 = vmatpush.bf16.msra.mxu0 %v1176
    %1455 = vmatpush.bf16.msra.mxu0 %v1174
    %1456 = vmatpush.bf16.msra.mxu0 %v1172
    %1457 = vmatmul.bf16.gmra.mxu0 %v1434
    %v1458 = vpop.f32.mrf.mxu0
    %v1459 = vadd.f32 0.0, %v1458
    %v1460 = vpop.f32.mrf.mxu0
    %1461 = vdwg.mxu0
    %v1462 = vadd.f32 %v1137, %v1446
    %v1463 = vadd.f32 %v1138, %v1459
    %v1464 = vxor.u32 %v1462, 2147483648
    %v1465 = vmul.f32 %v1464, 1.442695
    %v1466 = vpow.pop %v1465
    %v1467 = vadd.f32 %v1466, 1.0
    %v1468 = vrcp.pop %v1467
    %v1469 = vmul.f32 %v1467, %v1468
    %v1470 = vsub.f32 1.0, %v1469
    %v1471 = vmul.f32 %v1468, %v1470
    %v1472 = vadd.f32 %v1468, %v1471
    %vm1473 = vweird.f32 %v1467
    %vm1474 = vweird.f32 %v1468
    %vm1475 = vmor %vm1473, %vm1474
    %v1476 = vsel %vm1475, %v1468, %v1472
    %v1477 = vand.u32 2147483647, %v1467
    %vm1478 = vcmp.eq.f32.partialorder %v1477, 8.507059e+37
    %v1479 = vand.u32 %v1467, 2147483648
    %v1480 = vor.u32 1.1754944e-38, %v1479
    %v1481 = vsel %vm1478, %v1480, %v1476
    %v1482 = vmul.f32 1.0, %v1481
    %v1483 = vtanh.pop %v1463
    %v1484 = vxor.u32 %v1463, 2147483648
    %v1485 = vmul.f32 %v1484, 1.442695
    %v1486 = vpow.pop %v1485
    %v1487 = vadd.f32 %v1486, 1.0
    %v1488 = vrcp.pop %v1487
    %v1489 = vmul.f32 %v1487, %v1488
    %v1490 = vsub.f32 1.0, %v1489
    %v1491 = vmul.f32 %v1488, %v1490
    %v1492 = vadd.f32 %v1488, %v1491
    %vm1493 = vweird.f32 %v1487
    %vm1494 = vweird.f32 %v1488
    %vm1495 = vmor %vm1493, %vm1494
    %v1496 = vsel %vm1495, %v1488, %v1492
    %v1497 = vand.u32 2147483647, %v1487
    %vm1498 = vcmp.eq.f32.partialorder %v1497, 8.507059e+37
    %v1499 = vand.u32 %v1487, 2147483648
    %v1500 = vor.u32 1.1754944e-38, %v1499
    %v1501 = vsel %vm1498, %v1500, %v1496
    %v1502 = vmul.f32 1.0, %v1501
    %v1503 = vmul.f32 %v1482, %v1426
    %v1504 = vmul.f32 %v1482, %v1483
    %1506 = vrot.lane.b32.xlu0 %v1504, 64
    %v1507 = vpop.permute.xlu0 %1506
    %v1509 = vadd.f32 %v1503, %v1507
    %v1510 = vtanh.pop %v1509
    %v1511 = vmul.f32 %v1502, %v1510
    %v1512 = vpack.c.bf16 %v1511, %v1511
    %1514 = vrot.lane.b32.xlu0 %v1512, 64
    %v1515 = vpop.permute.xlu0 %1514
    %v1517 = vsel %vm300, %v1515, 0
    %1519 = vmatpush.bf16.msra.mxu0 0
    %1520 = vmatpush.bf16.msra.mxu0 0
    %1521 = vmatpush.bf16.msra.mxu0 0
    %1522 = vmatpush.bf16.msra.mxu0 0
    %1523 = vmatpush.bf16.msra.mxu0 %v1177
    %1524 = vmatpush.bf16.msra.mxu0 %v1175
    %1525 = vmatpush.bf16.msra.mxu0 %v1173
    %1526 = vmatpush.bf16.msra.mxu0 %v1171
    %1527 = vmatmul.bf16.gmra.mxu0 %v1517
    %v1528 = vpop.f32.mrf.mxu0
    %v1529 = vadd.f32 0.0, %v1528
    %v1530 = vpop.f32.mrf.mxu0
    %1531 = vdwg.mxu0
    %1532 = vmatpush.bf16.msra.mxu0 0
    %1533 = vmatpush.bf16.msra.mxu0 0
    %1534 = vmatpush.bf16.msra.mxu0 0
    %1535 = vmatpush.bf16.msra.mxu0 0
    %1536 = vmatpush.bf16.msra.mxu0 %v1178
    %1537 = vmatpush.bf16.msra.mxu0 %v1176
    %1538 = vmatpush.bf16.msra.mxu0 %v1174
    %1539 = vmatpush.bf16.msra.mxu0 %v1172
    %1540 = vmatmul.bf16.gmra.mxu0 %v1517
    %v1541 = vpop.f32.mrf.mxu0
    %v1542 = vadd.f32 0.0, %v1541
    %v1543 = vpop.f32.mrf.mxu0
    %1544 = vdwg.mxu0
    %v1545 = vadd.f32 %v1139, %v1529
    %v1546 = vadd.f32 %v1140, %v1542
    %v1547 = vxor.u32 %v1545, 2147483648
    %v1548 = vmul.f32 %v1547, 1.442695
    %v1549 = vpow.pop %v1548
    %v1550 = vadd.f32 %v1549, 1.0
    %v1551 = vrcp.pop %v1550
    %v1552 = vmul.f32 %v1550, %v1551
    %v1553 = vsub.f32 1.0, %v1552
    %v1554 = vmul.f32 %v1551, %v1553
    %v1555 = vadd.f32 %v1551, %v1554
    %vm1556 = vweird.f32 %v1550
    %vm1557 = vweird.f32 %v1551
    %vm1558 = vmor %vm1556, %vm1557
    %v1559 = vsel %vm1558, %v1551, %v1555
    %v1560 = vand.u32 2147483647, %v1550
    %vm1561 = vcmp.eq.f32.partialorder %v1560, 8.507059e+37
    %v1562 = vand.u32 %v1550, 2147483648
    %v1563 = vor.u32 1.1754944e-38, %v1562
    %v1564 = vsel %vm1561, %v1563, %v1559
    %v1565 = vmul.f32 1.0, %v1564
    %v1566 = vtanh.pop %v1546
    %v1567 = vxor.u32 %v1546, 2147483648
    %v1568 = vmul.f32 %v1567, 1.442695
    %v1569 = vpow.pop %v1568
    %v1570 = vadd.f32 %v1569, 1.0
    %v1571 = vrcp.pop %v1570
    %v1572 = vmul.f32 %v1570, %v1571
    %v1573 = vsub.f32 1.0, %v1572
    %v1574 = vmul.f32 %v1571, %v1573
    %v1575 = vadd.f32 %v1571, %v1574
    %vm1576 = vweird.f32 %v1570
    %vm1577 = vweird.f32 %v1571
    %vm1578 = vmor %vm1576, %vm1577
    %v1579 = vsel %vm1578, %v1571, %v1575
    %v1580 = vand.u32 2147483647, %v1570
    %vm1581 = vcmp.eq.f32.partialorder %v1580, 8.507059e+37
    %v1582 = vand.u32 %v1570, 2147483648
    %v1583 = vor.u32 1.1754944e-38, %v1582
    %v1584 = vsel %vm1581, %v1583, %v1579
    %v1585 = vmul.f32 1.0, %v1584
    %v1586 = vmul.f32 %v1565, %v1509
    %v1587 = vmul.f32 %v1565, %v1566
    %1589 = vrot.lane.b32.xlu0 %v1587, 64
    %v1590 = vpop.permute.xlu0 %1589
    %v1592 = vadd.f32 %v1586, %v1590
    %v1593 = vtanh.pop %v1592
    %v1594 = vmul.f32 %v1585, %v1593
    %v1595 = vpack.c.bf16 %v1594, %v1594
    %1597 = vrot.lane.b32.xlu0 %v1595, 64
    %v1598 = vpop.permute.xlu0 %1597
    %v1600 = vsel %vm300, %v1598, 0
    %1602 = vmatpush.bf16.msra.mxu0 0
    %1603 = vmatpush.bf16.msra.mxu0 0
    %1604 = vmatpush.bf16.msra.mxu0 0
    %1605 = vmatpush.bf16.msra.mxu0 0
    %1606 = vmatpush.bf16.msra.mxu0 %v1177
    %1607 = vmatpush.bf16.msra.mxu0 %v1175
    %1608 = vmatpush.bf16.msra.mxu0 %v1173
    %1609 = vmatpush.bf16.msra.mxu0 %v1171
    %1610 = vmatmul.bf16.gmra.mxu0 %v1600
    %v1611 = vpop.f32.mrf.mxu0
    %v1612 = vadd.f32 0.0, %v1611
    %v1613 = vpop.f32.mrf.mxu0
    %1614 = vdwg.mxu0
    %1615 = vmatpush.bf16.msra.mxu0 0
    %1616 = vmatpush.bf16.msra.mxu0 0
    %1617 = vmatpush.bf16.msra.mxu0 0
    %1618 = vmatpush.bf16.msra.mxu0 0
    %1619 = vmatpush.bf16.msra.mxu0 %v1178
    %1620 = vmatpush.bf16.msra.mxu0 %v1176
    %1621 = vmatpush.bf16.msra.mxu0 %v1174
    %1622 = vmatpush.bf16.msra.mxu0 %v1172
    %1623 = vmatmul.bf16.gmra.mxu0 %v1600
    %v1624 = vpop.f32.mrf.mxu0
    %v1625 = vadd.f32 0.0, %v1624
    %v1626 = vpop.f32.mrf.mxu0
    %1627 = vdwg.mxu0
    %v1628 = vadd.f32 %v1141, %v1612
    %v1629 = vadd.f32 %v1142, %v1625
    %v1630 = vxor.u32 %v1628, 2147483648
    %v1631 = vmul.f32 %v1630, 1.442695
    %v1632 = vpow.pop %v1631
    %v1633 = vadd.f32 %v1632, 1.0
    %v1634 = vrcp.pop %v1633
    %v1635 = vmul.f32 %v1633, %v1634
    %v1636 = vsub.f32 1.0, %v1635
    %v1637 = vmul.f32 %v1634, %v1636
    %v1638 = vadd.f32 %v1634, %v1637
    %vm1639 = vweird.f32 %v1633
    %vm1640 = vweird.f32 %v1634
    %vm1641 = vmor %vm1639, %vm1640
    %v1642 = vsel %vm1641, %v1634, %v1638
    %v1643 = vand.u32 2147483647, %v1633
    %vm1644 = vcmp.eq.f32.partialorder %v1643, 8.507059e+37
    %v1645 = vand.u32 %v1633, 2147483648
    %v1646 = vor.u32 1.1754944e-38, %v1645
    %v1647 = vsel %vm1644, %v1646, %v1642
    %v1648 = vmul.f32 1.0, %v1647
    %v1649 = vtanh.pop %v1629
    %v1650 = vxor.u32 %v1629, 2147483648
    %v1651 = vmul.f32 %v1650, 1.442695
    %v1652 = vpow.pop %v1651
    %v1653 = vadd.f32 %v1652, 1.0
    %v1654 = vrcp.pop %v1653
    %v1655 = vmul.f32 %v1653, %v1654
    %v1656 = vsub.f32 1.0, %v1655
    %v1657 = vmul.f32 %v1654, %v1656
    %v1658 = vadd.f32 %v1654, %v1657
    %vm1659 = vweird.f32 %v1653
    %vm1660 = vweird.f32 %v1654
    %vm1661 = vmor %vm1659, %vm1660
    %v1662 = vsel %vm1661, %v1654, %v1658
    %v1663 = vand.u32 2147483647, %v1653
    %vm1664 = vcmp.eq.f32.partialorder %v1663, 8.507059e+37
    %v1665 = vand.u32 %v1653, 2147483648
    %v1666 = vor.u32 1.1754944e-38, %v1665
    %v1667 = vsel %vm1664, %v1666, %v1662
    %v1668 = vmul.f32 1.0, %v1667
    %v1669 = vmul.f32 %v1648, %v1592
    %v1670 = vmul.f32 %v1648, %v1649
    %1672 = vrot.lane.b32.xlu0 %v1670, 64
    %v1673 = vpop.permute.xlu0 %1672
    %v1675 = vadd.f32 %v1669, %v1673
    %v1676 = vtanh.pop %v1675
    %v1677 = vmul.f32 %v1668, %v1676
    %v1678 = vpack.c.bf16 %v1677, %v1677
    %1680 = vrot.lane.b32.xlu0 %v1678, 64
    %v1681 = vpop.permute.xlu0 %1680
    %v1683 = vsel %vm300, %v1681, 0
    %1685 = vmatpush.bf16.msra.mxu0 0
    %1686 = vmatpush.bf16.msra.mxu0 0
    %1687 = vmatpush.bf16.msra.mxu0 0
    %1688 = vmatpush.bf16.msra.mxu0 0
    %1689 = vmatpush.bf16.msra.mxu0 %v1177
    %1690 = vmatpush.bf16.msra.mxu0 %v1175
    %1691 = vmatpush.bf16.msra.mxu0 %v1173
    %1692 = vmatpush.bf16.msra.mxu0 %v1171
    %1693 = vmatmul.bf16.gmra.mxu0 %v1683
    %v1694 = vpop.f32.mrf.mxu0
    %v1695 = vadd.f32 0.0, %v1694
    %v1696 = vpop.f32.mrf.mxu0
    %1697 = vdwg.mxu0
    %1698 = vmatpush.bf16.msra.mxu0 0
    %1699 = vmatpush.bf16.msra.mxu0 0
    %1700 = vmatpush.bf16.msra.mxu0 0
    %1701 = vmatpush.bf16.msra.mxu0 0
    %1702 = vmatpush.bf16.msra.mxu0 %v1178
    %1703 = vmatpush.bf16.msra.mxu0 %v1176
    %1704 = vmatpush.bf16.msra.mxu0 %v1174
    %1705 = vmatpush.bf16.msra.mxu0 %v1172
    %1706 = vmatmul.bf16.gmra.mxu0 %v1683
    %v1707 = vpop.f32.mrf.mxu0
    %v1708 = vadd.f32 0.0, %v1707
    %v1709 = vpop.f32.mrf.mxu0
    %1710 = vdwg.mxu0
    %v1711 = vadd.f32 %v1143, %v1695
    %v1712 = vadd.f32 %v1144, %v1708
    %v1713 = vxor.u32 %v1711, 2147483648
    %v1714 = vmul.f32 %v1713, 1.442695
    %v1715 = vpow.pop %v1714
    %v1716 = vadd.f32 %v1715, 1.0
    %v1717 = vrcp.pop %v1716
    %v1718 = vmul.f32 %v1716, %v1717
    %v1719 = vsub.f32 1.0, %v1718
    %v1720 = vmul.f32 %v1717, %v1719
    %v1721 = vadd.f32 %v1717, %v1720
    %vm1722 = vweird.f32 %v1716
    %vm1723 = vweird.f32 %v1717
    %vm1724 = vmor %vm1722, %vm1723
    %v1725 = vsel %vm1724, %v1717, %v1721
    %v1726 = vand.u32 2147483647, %v1716
    %vm1727 = vcmp.eq.f32.partialorder %v1726, 8.507059e+37
    %v1728 = vand.u32 %v1716, 2147483648
    %v1729 = vor.u32 1.1754944e-38, %v1728
    %v1730 = vsel %vm1727, %v1729, %v1725
    %v1731 = vmul.f32 1.0, %v1730
    %v1732 = vtanh.pop %v1712
    %v1733 = vxor.u32 %v1712, 2147483648
    %v1734 = vmul.f32 %v1733, 1.442695
    %v1735 = vpow.pop %v1734
    %v1736 = vadd.f32 %v1735, 1.0
    %v1737 = vrcp.pop %v1736
    %v1738 = vmul.f32 %v1736, %v1737
    %v1739 = vsub.f32 1.0, %v1738
    %v1740 = vmul.f32 %v1737, %v1739
    %v1741 = vadd.f32 %v1737, %v1740
    %vm1742 = vweird.f32 %v1736
    %vm1743 = vweird.f32 %v1737
    %vm1744 = vmor %vm1742, %vm1743
    %v1745 = vsel %vm1744, %v1737, %v1741
    %v1746 = vand.u32 2147483647, %v1736
    %vm1747 = vcmp.eq.f32.partialorder %v1746, 8.507059e+37
    %v1748 = vand.u32 %v1736, 2147483648
    %v1749 = vor.u32 1.1754944e-38, %v1748
    %v1750 = vsel %vm1747, %v1749, %v1745
    %v1751 = vmul.f32 1.0, %v1750
    %v1752 = vmul.f32 %v1731, %v1675
    %v1753 = vmul.f32 %v1731, %v1732
    %1755 = vrot.lane.b32.xlu0 %v1753, 64
    %v1756 = vpop.permute.xlu0 %1755
    %v1758 = vadd.f32 %v1752, %v1756
    %v1759 = vtanh.pop %v1758
    %v1760 = vmul.f32 %v1751, %v1759
    %v1761 = vpack.c.bf16 %v1760, %v1760
    %1763 = vrot.lane.b32.xlu0 %v1761, 64
    %v1764 = vpop.permute.xlu0 %1763
    %v1766 = vsel %vm300, %v1764, 0
    %1768 = vmatpush.bf16.msra.mxu0 0
    %1769 = vmatpush.bf16.msra.mxu0 0
    %1770 = vmatpush.bf16.msra.mxu0 0
    %1771 = vmatpush.bf16.msra.mxu0 0
    %1772 = vmatpush.bf16.msra.mxu0 %v1177
    %1773 = vmatpush.bf16.msra.mxu0 %v1175
    %1774 = vmatpush.bf16.msra.mxu0 %v1173
    %1775 = vmatpush.bf16.msra.mxu0 %v1171
    %1776 = vmatmul.bf16.gmra.mxu0 %v1766
    %v1777 = vpop.f32.mrf.mxu0
    %v1778 = vadd.f32 0.0, %v1777
    %v1779 = vpop.f32.mrf.mxu0
    %1780 = vdwg.mxu0
    %1781 = vmatpush.bf16.msra.mxu0 0
    %1782 = vmatpush.bf16.msra.mxu0 0
    %1783 = vmatpush.bf16.msra.mxu0 0
    %1784 = vmatpush.bf16.msra.mxu0 0
    %1785 = vmatpush.bf16.msra.mxu0 %v1178
    %1786 = vmatpush.bf16.msra.mxu0 %v1176
    %1787 = vmatpush.bf16.msra.mxu0 %v1174
    %1788 = vmatpush.bf16.msra.mxu0 %v1172
    %1789 = vmatmul.bf16.gmra.mxu0 %v1766
    %v1790 = vpop.f32.mrf.mxu0
    %v1791 = vadd.f32 0.0, %v1790
    %v1792 = vpop.f32.mrf.mxu0
    %1793 = vdwg.mxu0
    %v1794 = vadd.f32 %v1145, %v1778
    %v1795 = vadd.f32 %v1146, %v1791
    %v1796 = vxor.u32 %v1794, 2147483648
    %v1797 = vmul.f32 %v1796, 1.442695
    %v1798 = vpow.pop %v1797
    %v1799 = vadd.f32 %v1798, 1.0
    %v1800 = vrcp.pop %v1799
    %v1801 = vmul.f32 %v1799, %v1800
    %v1802 = vsub.f32 1.0, %v1801
    %v1803 = vmul.f32 %v1800, %v1802
    %v1804 = vadd.f32 %v1800, %v1803
    %vm1805 = vweird.f32 %v1799
    %vm1806 = vweird.f32 %v1800
    %vm1807 = vmor %vm1805, %vm1806
    %v1808 = vsel %vm1807, %v1800, %v1804
    %v1809 = vand.u32 2147483647, %v1799
    %vm1810 = vcmp.eq.f32.partialorder %v1809, 8.507059e+37
    %v1811 = vand.u32 %v1799, 2147483648
    %v1812 = vor.u32 1.1754944e-38, %v1811
    %v1813 = vsel %vm1810, %v1812, %v1808
    %v1814 = vmul.f32 1.0, %v1813
    %v1815 = vtanh.pop %v1795
    %v1816 = vxor.u32 %v1795, 2147483648
    %v1817 = vmul.f32 %v1816, 1.442695
    %v1818 = vpow.pop %v1817
    %v1819 = vadd.f32 %v1818, 1.0
    %v1820 = vrcp.pop %v1819
    %v1821 = vmul.f32 %v1819, %v1820
    %v1822 = vsub.f32 1.0, %v1821
    %v1823 = vmul.f32 %v1820, %v1822
    %v1824 = vadd.f32 %v1820, %v1823
    %vm1825 = vweird.f32 %v1819
    %vm1826 = vweird.f32 %v1820
    %vm1827 = vmor %vm1825, %vm1826
    %v1828 = vsel %vm1827, %v1820, %v1824
    %v1829 = vand.u32 2147483647, %v1819
    %vm1830 = vcmp.eq.f32.partialorder %v1829, 8.507059e+37
    %v1831 = vand.u32 %v1819, 2147483648
    %v1832 = vor.u32 1.1754944e-38, %v1831
    %v1833 = vsel %vm1830, %v1832, %v1828
    %v1834 = vmul.f32 1.0, %v1833
    %v1835 = vmul.f32 %v1814, %v1758
    %v1836 = vmul.f32 %v1814, %v1815
    %1838 = vrot.lane.b32.xlu0 %v1836, 64
    %v1839 = vpop.permute.xlu0 %1838
    %v1841 = vadd.f32 %v1835, %v1839
    %v1842 = vtanh.pop %v1841
    %v1843 = vmul.f32 %v1834, %v1842
    %v1844 = vpack.c.bf16 %v1843, %v1843
    %v1845 = vld [vmem:[#allocation4] sm:$0xf]
    %v1846 = vld [vmem:[#allocation4 + $0x4] sm:$0xf]
    %v1847 = vld [vmem:[#allocation4 + $0x8] sm:$0xf]
    %v1848 = vld [vmem:[#allocation4 + $0xc] sm:$0xf]
    %v1849 = vld [vmem:[#allocation4 + $0x10] sm:$0xf]
    %v1850 = vld [vmem:[#allocation4 + $0x14] sm:$0xf]
    %v1851 = vld [vmem:[#allocation4 + $0x18] sm:$0xf]
    %v1852 = vld [vmem:[#allocation4 + $0x1c] sm:$0xf]
    %v1853 = vld [vmem:[%s8] sm:$0x1]
    %v1855 = vperm.slane %v1853, 0
    %1858 = vrot.lane.b32.xlu0 %v1844, 64
    %v1859 = vpop.permute.xlu0 %1858
    %v1868 = vunpack.c.l.b16 %v1845
    %v1869 = vunpack.c.l.b16 %v1846
    %v1870 = vunpack.c.l.b16 %v1847
    %v1871 = vunpack.c.l.b16 %v1848
    %v1872 = vunpack.c.l.b16 %v1849
    %v1873 = vunpack.c.l.b16 %v1850
    %v1874 = vunpack.c.l.b16 %v1851
    %v1875 = vunpack.c.l.b16 %v1852
    %v1876 = vpack.c.b16 %v1869, %v1868
    %v1877 = vpack.c.b16 %v1871, %v1870
    %v1878 = vpack.c.b16 %v1873, %v1872
    %v1879 = vpack.c.b16 %v1875, %v1874
    %v1885 = vsel %vm300, %v1859, 0
    %1887 = vmatpush.bf16.msra.mxu0 0
    %1888 = vmatpush.bf16.msra.mxu0 0
    %1889 = vmatpush.bf16.msra.mxu0 0
    %1890 = vmatpush.bf16.msra.mxu0 0
    %1891 = vmatpush.bf16.msra.mxu0 %v1879
    %1892 = vmatpush.bf16.msra.mxu0 %v1878
    %1893 = vmatpush.bf16.msra.mxu0 %v1877
    %1894 = vmatpush.bf16.msra.mxu0 %v1876
    %1895 = vmatmul.bf16.gmra.mxu0 %v1885
    %v1896 = vpop.f32.mrf.mxu0
    %v1897 = vadd.f32 %v1855, %v1896
    %v1898 = vpop.f32.mrf.mxu0
    %1899 = vdwg.mxu0
    %1900 = vst [vmem:[%s9] sm:$0xff] %v1897
    // Predicated region
    $region46: #{rnn_forward.1} parent=1 // pred_check
      _
    $region47: #{rnn_forward.1} parent=1 // pred_check_branch
      %1902 = sbr.rel (0) target = $region49
    $region48: #{rnn_forward.1} parent=1 // pred_region
      _
    $region49: #{rnn_forward.1} parent=1 // pred_fallthru
      _
    // Predicated region
    $region50: #{rnn_forward.1} parent=1 // pred_check
      _
    $region51: #{rnn_forward.1} parent=1 // pred_check_branch
      %1904 = sbr.rel (0) target = $region53
    $region52: #{rnn_forward.1} parent=1 // pred_region
      _
    $region53: #{rnn_forward.1} parent=1 // pred_fallthru
      _
    %1905 = vsyncpa [#allocation3], 1
    %1906 = vsyncpa [#allocation5], 1

</llo_original>
